<compile_context>
chip_gen: v5e
topology: v5e:2x2
jax: 0.10.0
libtpu: 0.0.40
codegen_flags: <defaults>
</compile_context>

<pallas_src>
import jax
import jax.numpy as jnp
import numpy as np
from jax.experimental import pallas as pl
from jax.experimental.pallas import tpu as pltpu

LANE = 128
# Per-gate column scales folded into the packed weights/biases (PyTorch order i, f, g, o).
# i/f/o get 0.5 so sigmoid(x) becomes 0.5*tanh(scaled_pre)+0.5 (single EUP tanh); g is raw.
GATE_SCALES = (0.5, 0.5, 1.0, 0.5)


def _round_up(n, m):
    return ((n + m - 1) // m) * m


# ----------------------------------------------------------------------------- kernel
def encdec_kernel(x_ref, wih_e_ref, whh_e_ref, b_e_ref,
                  wih_d_ref, whh_d_ref, b_d_ref,
                  wout_ref, bout_ref, out_ref):
    f32 = jnp.float32
    seq_len = x_ref.shape[0]
    ge = whh_e_ref.shape[1] // 4      # encoder per-gate lane block (= padded E)
    bw = whh_d_ref.shape[0]           # decoder paired-block width (= 2 * padded 2E)
    dh = bw // 2                      # decoder per-gate lane width

    def sig(x):
        # Weights/bias for sigmoid gates were pre-scaled by 0.5 host-side, so this is
        # sigmoid(pre) = 0.5 * tanh(0.5 * pre) + 0.5 with a single EUP tanh.
        return 0.5 * jnp.tanh(x) + 0.5

    # ---------------- Encoder LSTM (one gate per 128-lane block) ----------------
    # bf16 weights are upcast to f32 once, outside the unrolled time loop.
    wih_e = wih_e_ref[...].astype(f32)
    whh_e = whh_e_ref[...].astype(f32)
    # n_features == 1: the input projection of the whole sequence is one broadcast
    # outer product (S, 1) * (1, 4*ge), hoisted out of the time loop.
    xproj = x_ref[...] * wih_e + b_e_ref[...]                       # (S, 4*ge)
    h = jnp.zeros((1, ge), f32)
    c = jnp.zeros((1, ge), f32)
    for t in range(seq_len):                                        # static unroll (S small)
        gates = xproj[t:t + 1, :] + jnp.dot(h, whh_e, preferred_element_type=f32)
        i = sig(gates[:, 0 * ge:1 * ge])
        f = sig(gates[:, 1 * ge:2 * ge])
        g = jnp.tanh(gates[:, 2 * ge:3 * ge])
        o = sig(gates[:, 3 * ge:4 * ge])
        c = f * c + i * g
        h = o * jnp.tanh(c)

    # ---------------- Decoder LSTM (two gates per 128-lane block) ----------------
    # Paired state layout (width bw = 2*dh):
    #   H = [junk | h]      (real hidden state in the upper dh lanes; whh_d rows for the
    #                        lower half are zero so the junk never contributes)
    #   C = [c    | c]      (cell state duplicated in both halves)
    wih_d = wih_d_ref[...].astype(f32)
    whh_d = whh_d_ref[...].astype(f32)
    # Decoder input is the same repeated encoder hidden every step -> project once.
    dinp = jnp.dot(h, wih_d, preferred_element_type=f32) + b_d_ref[...]   # (1, 2*bw)

    lane = jax.lax.broadcasted_iota(jnp.int32, (1, bw), 1)
    low = lane < dh
    b_scale = jnp.where(low, 1.0, 0.5).astype(f32)   # [g half keeps tanh | o half -> sigmoid]
    b_off = jnp.where(low, 0.0, 0.5).astype(f32)
    wout = wout_ref[...]                             # (1, bw); zeros in the lower half
    bout = bout_ref[...]                             # (1, 1)
    lane_s = jax.lax.broadcasted_iota(jnp.int32, (1, seq_len), 1)

    H = jnp.zeros((1, bw), f32)
    C = jnp.zeros((1, bw), f32)
    out_row = jnp.zeros((1, seq_len), f32)
    for t in range(seq_len):                                        # static unroll
        gates = dinp + jnp.dot(H, whh_d, preferred_element_type=f32)    # (1, 2*bw)
        A = sig(gates[:, 0:bw])                                     # [sig(i) | sig(f)]
        B = b_scale * jnp.tanh(gates[:, bw:2 * bw]) + b_off         # [tanh(g) | sig(o)]
        gc = jnp.where(low, B, C)                                   # [tanh(g) | c_prev]
        e = A * gc                                                  # [i*g     | f*c  ]
        C = e + pltpu.roll(e, dh, 1)                                # [c_new   | c_new] (XLU)
        H = B * jnp.tanh(C)                                         # [junk    | h_new]
        # Fused output Linear: lane reduce lands on the XLU, off the VPU/EUP chain.
        o_t = jnp.sum(H * wout, axis=-1, keepdims=True)             # (1, 1)
        out_row = out_row + jnp.where(lane_s == t, o_t, 0.0)

    out_ref[...] = out_row + bout                                   # (1, S) lane-dense row


# --------------------------------------------------------------------------- wrapper
def _pack_gate_cols(w, h_valid, h_pad):
    """(K, 4*h_valid) -> (K, 4*h_pad); gate k moved to lanes [k*h_pad, k*h_pad+h_valid)
    and scaled by GATE_SCALES[k] (folds the tanh-form sigmoid pre-scale into the weights)."""
    k_rows = w.shape[0]
    out = jnp.zeros((k_rows, 4 * h_pad), w.dtype)
    for k in range(4):
        out = out.at[:, k * h_pad:k * h_pad + h_valid].set(
            GATE_SCALES[k] * w[:, k * h_valid:(k + 1) * h_valid])
    return out


def _place_rows(w, n_rows, row_start=0):
    """Embed w's rows into a zero (n_rows, w.shape[1]) matrix starting at row_start."""
    out = jnp.zeros((n_rows, w.shape[1]), w.dtype)
    return out.at[row_start:row_start + w.shape[0], :].set(w)


def encoder_decoder_forward(x, params, seq_len, n_features, embedding_dim):
    assert n_features == 1, "PyTorch model's hidden_.reshape requires n_features == 1"
    E = embedding_dim
    H2 = 2 * E
    GE = _round_up(E, LANE)           # encoder per-gate lane block == encoder state width
    DH = _round_up(H2, LANE // 2)     # decoder per-gate lane width (two gates per 128 block)
    BW = 2 * DH                       # decoder paired-block / state width
    f32, bf16 = jnp.float32, jnp.bfloat16

    # Host-side repacking.  All padding is zero, so padded state lanes stay exactly zero
    # inside the kernel.  Large matmul weights are stored bf16 (DMA bytes); biases and the
    # tiny output projection stay f32 (added/multiplied on the f32 VPU path).
    wih_e = _pack_gate_cols(params["enc_w_ih"].T.astype(f32), E, GE).astype(bf16)            # (1, 4GE)
    whh_e = _place_rows(_pack_gate_cols(params["enc_w_hh"].T.astype(f32), E, GE),
                        GE).astype(bf16)                                                     # (GE, 4GE)
    b_e = _pack_gate_cols((params["enc_b_ih"] + params["enc_b_hh"]).astype(f32)[None, :],
                          E, GE)                                                             # (1, 4GE)
    wih_d = _place_rows(_pack_gate_cols(params["dec_w_ih"].T.astype(f32), H2, DH),
                        GE).astype(bf16)                                                     # (GE, 4DH)
    whh_d = _place_rows(_pack_gate_cols(params["dec_w_hh"].T.astype(f32), H2, DH),
                        BW, row_start=DH).astype(bf16)                                       # (BW, 4DH)
    b_d = _pack_gate_cols((params["dec_b_ih"] + params["dec_b_hh"]).astype(f32)[None, :],
                          H2, DH)                                                            # (1, 4DH)
    wout = jnp.zeros((1, BW), f32).at[:, DH:DH + H2].set(params["out_w"].astype(f32))        # (1, BW)
    bout = params["out_b"].astype(f32).reshape(1, 1)                                         # (1, 1)

    x2d = x.reshape(seq_len, n_features).astype(f32)

    ins = (x2d, wih_e, whh_e, b_e, wih_d, whh_d, b_d, wout, bout)
    in_specs = [pl.BlockSpec(a.shape, lambda i, n=a.ndim: (0,) * n) for a in ins]

    # Tiny-kernel cost hint for the XLA scheduler.
    flops = int(2 * seq_len * (GE * 4 * GE)        # encoder recurrent matmul
                + 2 * seq_len * (BW * 4 * DH)      # decoder recurrent matmul
                + 2 * GE * 4 * DH                  # decoder input projection (once)
                + 2 * seq_len * 4 * GE             # encoder input projection
                + 2 * seq_len * BW)                # fused output linear
    transcendentals = int(seq_len * (5 * GE + 3 * BW))
    bytes_accessed = int(sum(int(np.prod(a.shape)) * a.dtype.itemsize for a in ins)
                         + 4 * seq_len)

    out = pl.pallas_call(
        encdec_kernel,
        out_shape=jax.ShapeDtypeStruct((1, seq_len), f32),
        grid=(1,),
        in_specs=in_specs,
        out_specs=pl.BlockSpec((1, seq_len), lambda i: (0, 0)),
        compiler_params=pltpu.CompilerParams(
            dimension_semantics=("arbitrary",)),
        cost_estimate=pl.CostEstimate(
            flops=flops, transcendentals=transcendentals,
            bytes_accessed=bytes_accessed),
    )(*ins)
    # Lane-dense (1, S) kernel output -> PyTorch-shaped (S, n_features).
    return out.reshape(seq_len, n_features)


# ------------------------------------------------------------------------ params/ref
def init_params(key, n_features, embedding_dim):
    E = embedding_dim
    F = n_features
    H2 = 2 * E
    ks = jax.random.split(key, 10)

    def u(k, shape, scale):
        return jax.random.uniform(k, shape, jnp.float32, -scale, scale)

    se = 1.0 / np.sqrt(E)
    sd = 1.0 / np.sqrt(H2)
    return dict(
        enc_w_ih=u(ks[0], (4 * E, F), se),
        enc_w_hh=u(ks[1], (4 * E, E), se),
        enc_b_ih=u(ks[2], (4 * E,), se),
        enc_b_hh=u(ks[3], (4 * E,), se),
        dec_w_ih=u(ks[4], (4 * H2, E), sd),
        dec_w_hh=u(ks[5], (4 * H2, H2), sd),
        dec_b_ih=u(ks[6], (4 * H2,), sd),
        dec_b_hh=u(ks[7], (4 * H2,), sd),
        out_w=u(ks[8], (F, H2), sd),
        out_b=u(ks[9], (F,), sd),
    )


def reference_forward(x, params, seq_len, n_features, embedding_dim):
    """Pure-JAX reference that mirrors the PyTorch forward exactly."""
    E = embedding_dim
    H2 = 2 * E

    def lstm(seq, w_ih, w_hh, b_ih, b_hh, H):
        h = jnp.zeros((H,), jnp.float32)
        c = jnp.zeros((H,), jnp.float32)
        hs = []
        for t in range(seq.shape[0]):
            gates = w_ih @ seq[t] + b_ih + w_hh @ h + b_hh
            i, f, g, o = jnp.split(gates, 4)
            i = jax.nn.sigmoid(i)
            f = jax.nn.sigmoid(f)
            g = jnp.tanh(g)
            o = jax.nn.sigmoid(o)
            c = f * c + i * g
            h = o * jnp.tanh(c)
            hs.append(h)
        return jnp.stack(hs), h

    xs = x.reshape(seq_len, n_features).astype(jnp.float32)
    _, h_enc = lstm(xs, params["enc_w_ih"], params["enc_w_hh"],
                    params["enc_b_ih"], params["enc_b_hh"], E)
    # hidden_.reshape((n_features, E)).repeat(seq_len, n_features) with n_features == 1
    dec_in = jnp.tile(h_enc[None, :], (seq_len, 1))
    dec_hs, _ = lstm(dec_in, params["dec_w_ih"], params["dec_w_hh"],
                     params["dec_b_ih"], params["dec_b_hh"], H2)
    return dec_hs @ params["out_w"].T + params["out_b"]


if __name__ == "__main__":
    seq_len, n_features, embedding_dim = 8, 1, 32

    key = jax.random.PRNGKey(0)
    pkey, xkey = jax.random.split(key)
    params = init_params(pkey, n_features, embedding_dim)
    x = jax.random.normal(xkey, (seq_len, n_features), jnp.float32)

    out = encoder_decoder_forward(x, params, seq_len, n_features, embedding_dim)
    out = jax.block_until_ready(out)

    # Exact check: same bf16-rounded weight storage as the kernel, all math in f32.
    params_r = dict(params)
    for k in ("enc_w_ih", "enc_w_hh", "dec_w_ih", "dec_w_hh"):
        params_r[k] = params[k].astype(jnp.bfloat16).astype(jnp.float32)
    ref_exact = reference_forward(x, params_r, seq_len, n_features, embedding_dim)
    np.testing.assert_allclose(np.asarray(out), np.asarray(ref_exact),
                               rtol=1e-3, atol=1e-3)

    # Sanity check vs. the full-f32 PyTorch-equivalent reference (bf16 weight storage is
    # the only perturbation).
    ref_f32 = reference_forward(x, params, seq_len, n_features, embedding_dim)
    np.testing.assert_allclose(np.asarray(out), np.asarray(ref_f32),
                               rtol=5e-2, atol=5e-2)

    print("KERNEL_OK")
</pallas_src>

<mosaic_0001>
module attributes {stable_mosaic.version = 11 : i64} {
  func.func @encdec_kernel(%arg0: i32, %arg1: memref<8x1xf32, #tpu.memory_space<vmem>>, %arg2: memref<1x512xbf16, #tpu.memory_space<vmem>>, %arg3: memref<128x512xbf16, #tpu.memory_space<vmem>>, %arg4: memref<1x512xf32, #tpu.memory_space<vmem>>, %arg5: memref<128x256xbf16, #tpu.memory_space<vmem>>, %arg6: memref<128x256xbf16, #tpu.memory_space<vmem>>, %arg7: memref<1x256xf32, #tpu.memory_space<vmem>>, %arg8: memref<1x128xf32, #tpu.memory_space<vmem>>, %arg9: memref<1x1xf32, #tpu.memory_space<vmem>>, %arg10: memref<1x8xf32, #tpu.memory_space<vmem>>) attributes {dimension_semantics = [#tpu.dimension_semantics<arbitrary>], iteration_bounds = array<i64: 1>, scalar_prefetch = 0 : i64, scratch_operands = 0 : i64, tpu.core_type = #tpu.core_type<tc>, window_params = [{pipeline_mode = #tpu.pipeline_mode<synchronous>, transform_indices = @transform_0, window_bounds = array<i64: 8, 1>}, {pipeline_mode = #tpu.pipeline_mode<synchronous>, transform_indices = @transform_1, window_bounds = array<i64: 1, 512>}, {pipeline_mode = #tpu.pipeline_mode<synchronous>, transform_indices = @transform_2, window_bounds = array<i64: 128, 512>}, {pipeline_mode = #tpu.pipeline_mode<synchronous>, transform_indices = @transform_3, window_bounds = array<i64: 1, 512>}, {pipeline_mode = #tpu.pipeline_mode<synchronous>, transform_indices = @transform_4, window_bounds = array<i64: 128, 256>}, {pipeline_mode = #tpu.pipeline_mode<synchronous>, transform_indices = @transform_5, window_bounds = array<i64: 128, 256>}, {pipeline_mode = #tpu.pipeline_mode<synchronous>, transform_indices = @transform_6, window_bounds = array<i64: 1, 256>}, {pipeline_mode = #tpu.pipeline_mode<synchronous>, transform_indices = @transform_7, window_bounds = array<i64: 1, 128>}, {pipeline_mode = #tpu.pipeline_mode<synchronous>, transform_indices = @transform_8, window_bounds = array<i64: 1, 1>}, {pipeline_mode = #tpu.pipeline_mode<synchronous>, transform_indices = @transform_9, window_bounds = array<i64: 1, 8>}]} {
    %c0 = arith.constant 0 : index
    %c0_0 = arith.constant 0 : index
    %0 = vector.load %arg2[%c0, %c0_0] : memref<1x512xbf16, #tpu.memory_space<vmem>>, vector<1x512xbf16>
    %1 = arith.extf %0 : vector<1x512xbf16> to vector<1x512xf32>
    %c0_1 = arith.constant 0 : index
    %c0_2 = arith.constant 0 : index
    %2 = vector.load %arg3[%c0_1, %c0_2] : memref<128x512xbf16, #tpu.memory_space<vmem>>, vector<128x512xbf16>
    %3 = arith.extf %2 : vector<128x512xbf16> to vector<128x512xf32>
    %c0_3 = arith.constant 0 : index
    %c0_4 = arith.constant 0 : index
    %4 = vector.load %arg1[%c0_3, %c0_4] : memref<8x1xf32, #tpu.memory_space<vmem>>, vector<8x1xf32>
    %5 = vector.broadcast %4 : vector<8x1xf32> to vector<8x512xf32>
    %6 = vector.broadcast %1 : vector<1x512xf32> to vector<8x512xf32>
    %7 = arith.mulf %5, %6 : vector<8x512xf32>
    %c0_5 = arith.constant 0 : index
    %c0_6 = arith.constant 0 : index
    %8 = vector.load %arg4[%c0_5, %c0_6] : memref<1x512xf32, #tpu.memory_space<vmem>>, vector<1x512xf32>
    %9 = vector.broadcast %8 : vector<1x512xf32> to vector<8x512xf32>
    %10 = arith.addf %7, %9 : vector<8x512xf32>
    %cst = arith.constant 0.000000e+00 : f32
    %11 = vector.broadcast %cst : f32 to vector<1x128xf32>
    %cst_7 = arith.constant 0.000000e+00 : f32
    %12 = vector.broadcast %cst_7 : f32 to vector<1x128xf32>
    %13 = vector.extract_strided_slice %10 {offsets = [0, 0], sizes = [1, 512], strides = [1, 1]} : vector<8x512xf32> to vector<1x512xf32>
    %cst_8 = arith.constant dense<0.000000e+00> : vector<1x512xf32>
    %14 = tpu.matmul %11, %3, %cst_8 {dimension_numbers = #tpu.dot_dimension_numbers<[1], [0], [0], [1], [0, 0, 1, 1], [], []>} : vector<1x128xf32>, vector<128x512xf32>, vector<1x512xf32> -> vector<1x512xf32>
    %15 = arith.addf %13, %14 : vector<1x512xf32>
    %16 = vector.extract_strided_slice %15 {offsets = [0, 0], sizes = [1, 128], strides = [1, 1]} : vector<1x512xf32> to vector<1x128xf32>
    %17 = math.tanh %16 : vector<1x128xf32>
    %cst_9 = arith.constant 5.000000e-01 : f32
    %18 = vector.broadcast %cst_9 : f32 to vector<1x128xf32>
    %19 = arith.mulf %18, %17 : vector<1x128xf32>
    %cst_10 = arith.constant 5.000000e-01 : f32
    %20 = vector.broadcast %cst_10 : f32 to vector<1x128xf32>
    %21 = arith.addf %19, %20 : vector<1x128xf32>
    %22 = vector.extract_strided_slice %15 {offsets = [0, 128], sizes = [1, 128], strides = [1, 1]} : vector<1x512xf32> to vector<1x128xf32>
    %23 = math.tanh %22 : vector<1x128xf32>
    %cst_11 = arith.constant 5.000000e-01 : f32
    %24 = vector.broadcast %cst_11 : f32 to vector<1x128xf32>
    %25 = arith.mulf %24, %23 : vector<1x128xf32>
    %cst_12 = arith.constant 5.000000e-01 : f32
    %26 = vector.broadcast %cst_12 : f32 to vector<1x128xf32>
    %27 = arith.addf %25, %26 : vector<1x128xf32>
    %28 = vector.extract_strided_slice %15 {offsets = [0, 256], sizes = [1, 128], strides = [1, 1]} : vector<1x512xf32> to vector<1x128xf32>
    %29 = math.tanh %28 : vector<1x128xf32>
    %30 = vector.extract_strided_slice %15 {offsets = [0, 384], sizes = [1, 128], strides = [1, 1]} : vector<1x512xf32> to vector<1x128xf32>
    %31 = math.tanh %30 : vector<1x128xf32>
    %cst_13 = arith.constant 5.000000e-01 : f32
    %32 = vector.broadcast %cst_13 : f32 to vector<1x128xf32>
    %33 = arith.mulf %32, %31 : vector<1x128xf32>
    %cst_14 = arith.constant 5.000000e-01 : f32
    %34 = vector.broadcast %cst_14 : f32 to vector<1x128xf32>
    %35 = arith.addf %33, %34 : vector<1x128xf32>
    %36 = arith.mulf %27, %12 : vector<1x128xf32>
    %37 = arith.mulf %21, %29 : vector<1x128xf32>
    %38 = arith.addf %36, %37 : vector<1x128xf32>
    %39 = math.tanh %38 : vector<1x128xf32>
    %40 = arith.mulf %35, %39 : vector<1x128xf32>
    %41 = vector.extract_strided_slice %10 {offsets = [1, 0], sizes = [1, 512], strides = [1, 1]} : vector<8x512xf32> to vector<1x512xf32>
    %cst_15 = arith.constant dense<0.000000e+00> : vector<1x512xf32>
    %42 = tpu.matmul %40, %3, %cst_15 {dimension_numbers = #tpu.dot_dimension_numbers<[1], [0], [0], [1], [0, 0, 1, 1], [], []>} : vector<1x128xf32>, vector<128x512xf32>, vector<1x512xf32> -> vector<1x512xf32>
    %43 = arith.addf %41, %42 : vector<1x512xf32>
    %44 = vector.extract_strided_slice %43 {offsets = [0, 0], sizes = [1, 128], strides = [1, 1]} : vector<1x512xf32> to vector<1x128xf32>
    %45 = math.tanh %44 : vector<1x128xf32>
    %cst_16 = arith.constant 5.000000e-01 : f32
    %46 = vector.broadcast %cst_16 : f32 to vector<1x128xf32>
    %47 = arith.mulf %46, %45 : vector<1x128xf32>
    %cst_17 = arith.constant 5.000000e-01 : f32
    %48 = vector.broadcast %cst_17 : f32 to vector<1x128xf32>
    %49 = arith.addf %47, %48 : vector<1x128xf32>
    %50 = vector.extract_strided_slice %43 {offsets = [0, 128], sizes = [1, 128], strides = [1, 1]} : vector<1x512xf32> to vector<1x128xf32>
    %51 = math.tanh %50 : vector<1x128xf32>
    %cst_18 = arith.constant 5.000000e-01 : f32
    %52 = vector.broadcast %cst_18 : f32 to vector<1x128xf32>
    %53 = arith.mulf %52, %51 : vector<1x128xf32>
    %cst_19 = arith.constant 5.000000e-01 : f32
    %54 = vector.broadcast %cst_19 : f32 to vector<1x128xf32>
    %55 = arith.addf %53, %54 : vector<1x128xf32>
    %56 = vector.extract_strided_slice %43 {offsets = [0, 256], sizes = [1, 128], strides = [1, 1]} : vector<1x512xf32> to vector<1x128xf32>
    %57 = math.tanh %56 : vector<1x128xf32>
    %58 = vector.extract_strided_slice %43 {offsets = [0, 384], sizes = [1, 128], strides = [1, 1]} : vector<1x512xf32> to vector<1x128xf32>
    %59 = math.tanh %58 : vector<1x128xf32>
    %cst_20 = arith.constant 5.000000e-01 : f32
    %60 = vector.broadcast %cst_20 : f32 to vector<1x128xf32>
    %61 = arith.mulf %60, %59 : vector<1x128xf32>
    %cst_21 = arith.constant 5.000000e-01 : f32
    %62 = vector.broadcast %cst_21 : f32 to vector<1x128xf32>
    %63 = arith.addf %61, %62 : vector<1x128xf32>
    %64 = arith.mulf %55, %38 : vector<1x128xf32>
    %65 = arith.mulf %49, %57 : vector<1x128xf32>
    %66 = arith.addf %64, %65 : vector<1x128xf32>
    %67 = math.tanh %66 : vector<1x128xf32>
    %68 = arith.mulf %63, %67 : vector<1x128xf32>
    %69 = vector.extract_strided_slice %10 {offsets = [2, 0], sizes = [1, 512], strides = [1, 1]} : vector<8x512xf32> to vector<1x512xf32>
    %cst_22 = arith.constant dense<0.000000e+00> : vector<1x512xf32>
    %70 = tpu.matmul %68, %3, %cst_22 {dimension_numbers = #tpu.dot_dimension_numbers<[1], [0], [0], [1], [0, 0, 1, 1], [], []>} : vector<1x128xf32>, vector<128x512xf32>, vector<1x512xf32> -> vector<1x512xf32>
    %71 = arith.addf %69, %70 : vector<1x512xf32>
    %72 = vector.extract_strided_slice %71 {offsets = [0, 0], sizes = [1, 128], strides = [1, 1]} : vector<1x512xf32> to vector<1x128xf32>
    %73 = math.tanh %72 : vector<1x128xf32>
    %cst_23 = arith.constant 5.000000e-01 : f32
    %74 = vector.broadcast %cst_23 : f32 to vector<1x128xf32>
    %75 = arith.mulf %74, %73 : vector<1x128xf32>
    %cst_24 = arith.constant 5.000000e-01 : f32
    %76 = vector.broadcast %cst_24 : f32 to vector<1x128xf32>
    %77 = arith.addf %75, %76 : vector<1x128xf32>
    %78 = vector.extract_strided_slice %71 {offsets = [0, 128], sizes = [1, 128], strides = [1, 1]} : vector<1x512xf32> to vector<1x128xf32>
    %79 = math.tanh %78 : vector<1x128xf32>
    %cst_25 = arith.constant 5.000000e-01 : f32
    %80 = vector.broadcast %cst_25 : f32 to vector<1x128xf32>
    %81 = arith.mulf %80, %79 : vector<1x128xf32>
    %cst_26 = arith.constant 5.000000e-01 : f32
    %82 = vector.broadcast %cst_26 : f32 to vector<1x128xf32>
    %83 = arith.addf %81, %82 : vector<1x128xf32>
    %84 = vector.extract_strided_slice %71 {offsets = [0, 256], sizes = [1, 128], strides = [1, 1]} : vector<1x512xf32> to vector<1x128xf32>
    %85 = math.tanh %84 : vector<1x128xf32>
    %86 = vector.extract_strided_slice %71 {offsets = [0, 384], sizes = [1, 128], strides = [1, 1]} : vector<1x512xf32> to vector<1x128xf32>
    %87 = math.tanh %86 : vector<1x128xf32>
    %cst_27 = arith.constant 5.000000e-01 : f32
    %88 = vector.broadcast %cst_27 : f32 to vector<1x128xf32>
    %89 = arith.mulf %88, %87 : vector<1x128xf32>
    %cst_28 = arith.constant 5.000000e-01 : f32
    %90 = vector.broadcast %cst_28 : f32 to vector<1x128xf32>
    %91 = arith.addf %89, %90 : vector<1x128xf32>
    %92 = arith.mulf %83, %66 : vector<1x128xf32>
    %93 = arith.mulf %77, %85 : vector<1x128xf32>
    %94 = arith.addf %92, %93 : vector<1x128xf32>
    %95 = math.tanh %94 : vector<1x128xf32>
    %96 = arith.mulf %91, %95 : vector<1x128xf32>
    %97 = vector.extract_strided_slice %10 {offsets = [3, 0], sizes = [1, 512], strides = [1, 1]} : vector<8x512xf32> to vector<1x512xf32>
    %cst_29 = arith.constant dense<0.000000e+00> : vector<1x512xf32>
    %98 = tpu.matmul %96, %3, %cst_29 {dimension_numbers = #tpu.dot_dimension_numbers<[1], [0], [0], [1], [0, 0, 1, 1], [], []>} : vector<1x128xf32>, vector<128x512xf32>, vector<1x512xf32> -> vector<1x512xf32>
    %99 = arith.addf %97, %98 : vector<1x512xf32>
    %100 = vector.extract_strided_slice %99 {offsets = [0, 0], sizes = [1, 128], strides = [1, 1]} : vector<1x512xf32> to vector<1x128xf32>
    %101 = math.tanh %100 : vector<1x128xf32>
    %cst_30 = arith.constant 5.000000e-01 : f32
    %102 = vector.broadcast %cst_30 : f32 to vector<1x128xf32>
    %103 = arith.mulf %102, %101 : vector<1x128xf32>
    %cst_31 = arith.constant 5.000000e-01 : f32
    %104 = vector.broadcast %cst_31 : f32 to vector<1x128xf32>
    %105 = arith.addf %103, %104 : vector<1x128xf32>
    %106 = vector.extract_strided_slice %99 {offsets = [0, 128], sizes = [1, 128], strides = [1, 1]} : vector<1x512xf32> to vector<1x128xf32>
    %107 = math.tanh %106 : vector<1x128xf32>
    %cst_32 = arith.constant 5.000000e-01 : f32
    %108 = vector.broadcast %cst_32 : f32 to vector<1x128xf32>
    %109 = arith.mulf %108, %107 : vector<1x128xf32>
    %cst_33 = arith.constant 5.000000e-01 : f32
    %110 = vector.broadcast %cst_33 : f32 to vector<1x128xf32>
    %111 = arith.addf %109, %110 : vector<1x128xf32>
    %112 = vector.extract_strided_slice %99 {offsets = [0, 256], sizes = [1, 128], strides = [1, 1]} : vector<1x512xf32> to vector<1x128xf32>
    %113 = math.tanh %112 : vector<1x128xf32>
    %114 = vector.extract_strided_slice %99 {offsets = [0, 384], sizes = [1, 128], strides = [1, 1]} : vector<1x512xf32> to vector<1x128xf32>
    %115 = math.tanh %114 : vector<1x128xf32>
    %cst_34 = arith.constant 5.000000e-01 : f32
    %116 = vector.broadcast %cst_34 : f32 to vector<1x128xf32>
    %117 = arith.mulf %116, %115 : vector<1x128xf32>
    %cst_35 = arith.constant 5.000000e-01 : f32
    %118 = vector.broadcast %cst_35 : f32 to vector<1x128xf32>
    %119 = arith.addf %117, %118 : vector<1x128xf32>
    %120 = arith.mulf %111, %94 : vector<1x128xf32>
    %121 = arith.mulf %105, %113 : vector<1x128xf32>
    %122 = arith.addf %120, %121 : vector<1x128xf32>
    %123 = math.tanh %122 : vector<1x128xf32>
    %124 = arith.mulf %119, %123 : vector<1x128xf32>
    %125 = vector.extract_strided_slice %10 {offsets = [4, 0], sizes = [1, 512], strides = [1, 1]} : vector<8x512xf32> to vector<1x512xf32>
    %cst_36 = arith.constant dense<0.000000e+00> : vector<1x512xf32>
    %126 = tpu.matmul %124, %3, %cst_36 {dimension_numbers = #tpu.dot_dimension_numbers<[1], [0], [0], [1], [0, 0, 1, 1], [], []>} : vector<1x128xf32>, vector<128x512xf32>, vector<1x512xf32> -> vector<1x512xf32>
    %127 = arith.addf %125, %126 : vector<1x512xf32>
    %128 = vector.extract_strided_slice %127 {offsets = [0, 0], sizes = [1, 128], strides = [1, 1]} : vector<1x512xf32> to vector<1x128xf32>
    %129 = math.tanh %128 : vector<1x128xf32>
    %cst_37 = arith.constant 5.000000e-01 : f32
    %130 = vector.broadcast %cst_37 : f32 to vector<1x128xf32>
    %131 = arith.mulf %130, %129 : vector<1x128xf32>
    %cst_38 = arith.constant 5.000000e-01 : f32
    %132 = vector.broadcast %cst_38 : f32 to vector<1x128xf32>
    %133 = arith.addf %131, %132 : vector<1x128xf32>
    %134 = vector.extract_strided_slice %127 {offsets = [0, 128], sizes = [1, 128], strides = [1, 1]} : vector<1x512xf32> to vector<1x128xf32>
    %135 = math.tanh %134 : vector<1x128xf32>
    %cst_39 = arith.constant 5.000000e-01 : f32
    %136 = vector.broadcast %cst_39 : f32 to vector<1x128xf32>
    %137 = arith.mulf %136, %135 : vector<1x128xf32>
    %cst_40 = arith.constant 5.000000e-01 : f32
    %138 = vector.broadcast %cst_40 : f32 to vector<1x128xf32>
    %139 = arith.addf %137, %138 : vector<1x128xf32>
    %140 = vector.extract_strided_slice %127 {offsets = [0, 256], sizes = [1, 128], strides = [1, 1]} : vector<1x512xf32> to vector<1x128xf32>
    %141 = math.tanh %140 : vector<1x128xf32>
    %142 = vector.extract_strided_slice %127 {offsets = [0, 384], sizes = [1, 128], strides = [1, 1]} : vector<1x512xf32> to vector<1x128xf32>
    %143 = math.tanh %142 : vector<1x128xf32>
    %cst_41 = arith.constant 5.000000e-01 : f32
    %144 = vector.broadcast %cst_41 : f32 to vector<1x128xf32>
    %145 = arith.mulf %144, %143 : vector<1x128xf32>
    %cst_42 = arith.constant 5.000000e-01 : f32
    %146 = vector.broadcast %cst_42 : f32 to vector<1x128xf32>
    %147 = arith.addf %145, %146 : vector<1x128xf32>
    %148 = arith.mulf %139, %122 : vector<1x128xf32>
    %149 = arith.mulf %133, %141 : vector<1x128xf32>
    %150 = arith.addf %148, %149 : vector<1x128xf32>
    %151 = math.tanh %150 : vector<1x128xf32>
    %152 = arith.mulf %147, %151 : vector<1x128xf32>
    %153 = vector.extract_strided_slice %10 {offsets = [5, 0], sizes = [1, 512], strides = [1, 1]} : vector<8x512xf32> to vector<1x512xf32>
    %cst_43 = arith.constant dense<0.000000e+00> : vector<1x512xf32>
    %154 = tpu.matmul %152, %3, %cst_43 {dimension_numbers = #tpu.dot_dimension_numbers<[1], [0], [0], [1], [0, 0, 1, 1], [], []>} : vector<1x128xf32>, vector<128x512xf32>, vector<1x512xf32> -> vector<1x512xf32>
    %155 = arith.addf %153, %154 : vector<1x512xf32>
    %156 = vector.extract_strided_slice %155 {offsets = [0, 0], sizes = [1, 128], strides = [1, 1]} : vector<1x512xf32> to vector<1x128xf32>
    %157 = math.tanh %156 : vector<1x128xf32>
    %cst_44 = arith.constant 5.000000e-01 : f32
    %158 = vector.broadcast %cst_44 : f32 to vector<1x128xf32>
    %159 = arith.mulf %158, %157 : vector<1x128xf32>
    %cst_45 = arith.constant 5.000000e-01 : f32
    %160 = vector.broadcast %cst_45 : f32 to vector<1x128xf32>
    %161 = arith.addf %159, %160 : vector<1x128xf32>
    %162 = vector.extract_strided_slice %155 {offsets = [0, 128], sizes = [1, 128], strides = [1, 1]} : vector<1x512xf32> to vector<1x128xf32>
    %163 = math.tanh %162 : vector<1x128xf32>
    %cst_46 = arith.constant 5.000000e-01 : f32
    %164 = vector.broadcast %cst_46 : f32 to vector<1x128xf32>
    %165 = arith.mulf %164, %163 : vector<1x128xf32>
    %cst_47 = arith.constant 5.000000e-01 : f32
    %166 = vector.broadcast %cst_47 : f32 to vector<1x128xf32>
    %167 = arith.addf %165, %166 : vector<1x128xf32>
    %168 = vector.extract_strided_slice %155 {offsets = [0, 256], sizes = [1, 128], strides = [1, 1]} : vector<1x512xf32> to vector<1x128xf32>
    %169 = math.tanh %168 : vector<1x128xf32>
    %170 = vector.extract_strided_slice %155 {offsets = [0, 384], sizes = [1, 128], strides = [1, 1]} : vector<1x512xf32> to vector<1x128xf32>
    %171 = math.tanh %170 : vector<1x128xf32>
    %cst_48 = arith.constant 5.000000e-01 : f32
    %172 = vector.broadcast %cst_48 : f32 to vector<1x128xf32>
    %173 = arith.mulf %172, %171 : vector<1x128xf32>
    %cst_49 = arith.constant 5.000000e-01 : f32
    %174 = vector.broadcast %cst_49 : f32 to vector<1x128xf32>
    %175 = arith.addf %173, %174 : vector<1x128xf32>
    %176 = arith.mulf %167, %150 : vector<1x128xf32>
    %177 = arith.mulf %161, %169 : vector<1x128xf32>
    %178 = arith.addf %176, %177 : vector<1x128xf32>
    %179 = math.tanh %178 : vector<1x128xf32>
    %180 = arith.mulf %175, %179 : vector<1x128xf32>
    %181 = vector.extract_strided_slice %10 {offsets = [6, 0], sizes = [1, 512], strides = [1, 1]} : vector<8x512xf32> to vector<1x512xf32>
    %cst_50 = arith.constant dense<0.000000e+00> : vector<1x512xf32>
    %182 = tpu.matmul %180, %3, %cst_50 {dimension_numbers = #tpu.dot_dimension_numbers<[1], [0], [0], [1], [0, 0, 1, 1], [], []>} : vector<1x128xf32>, vector<128x512xf32>, vector<1x512xf32> -> vector<1x512xf32>
    %183 = arith.addf %181, %182 : vector<1x512xf32>
    %184 = vector.extract_strided_slice %183 {offsets = [0, 0], sizes = [1, 128], strides = [1, 1]} : vector<1x512xf32> to vector<1x128xf32>
    %185 = math.tanh %184 : vector<1x128xf32>
    %cst_51 = arith.constant 5.000000e-01 : f32
    %186 = vector.broadcast %cst_51 : f32 to vector<1x128xf32>
    %187 = arith.mulf %186, %185 : vector<1x128xf32>
    %cst_52 = arith.constant 5.000000e-01 : f32
    %188 = vector.broadcast %cst_52 : f32 to vector<1x128xf32>
    %189 = arith.addf %187, %188 : vector<1x128xf32>
    %190 = vector.extract_strided_slice %183 {offsets = [0, 128], sizes = [1, 128], strides = [1, 1]} : vector<1x512xf32> to vector<1x128xf32>
    %191 = math.tanh %190 : vector<1x128xf32>
    %cst_53 = arith.constant 5.000000e-01 : f32
    %192 = vector.broadcast %cst_53 : f32 to vector<1x128xf32>
    %193 = arith.mulf %192, %191 : vector<1x128xf32>
    %cst_54 = arith.constant 5.000000e-01 : f32
    %194 = vector.broadcast %cst_54 : f32 to vector<1x128xf32>
    %195 = arith.addf %193, %194 : vector<1x128xf32>
    %196 = vector.extract_strided_slice %183 {offsets = [0, 256], sizes = [1, 128], strides = [1, 1]} : vector<1x512xf32> to vector<1x128xf32>
    %197 = math.tanh %196 : vector<1x128xf32>
    %198 = vector.extract_strided_slice %183 {offsets = [0, 384], sizes = [1, 128], strides = [1, 1]} : vector<1x512xf32> to vector<1x128xf32>
    %199 = math.tanh %198 : vector<1x128xf32>
    %cst_55 = arith.constant 5.000000e-01 : f32
    %200 = vector.broadcast %cst_55 : f32 to vector<1x128xf32>
    %201 = arith.mulf %200, %199 : vector<1x128xf32>
    %cst_56 = arith.constant 5.000000e-01 : f32
    %202 = vector.broadcast %cst_56 : f32 to vector<1x128xf32>
    %203 = arith.addf %201, %202 : vector<1x128xf32>
    %204 = arith.mulf %195, %178 : vector<1x128xf32>
    %205 = arith.mulf %189, %197 : vector<1x128xf32>
    %206 = arith.addf %204, %205 : vector<1x128xf32>
    %207 = math.tanh %206 : vector<1x128xf32>
    %208 = arith.mulf %203, %207 : vector<1x128xf32>
    %209 = vector.extract_strided_slice %10 {offsets = [7, 0], sizes = [1, 512], strides = [1, 1]} : vector<8x512xf32> to vector<1x512xf32>
    %cst_57 = arith.constant dense<0.000000e+00> : vector<1x512xf32>
    %210 = tpu.matmul %208, %3, %cst_57 {dimension_numbers = #tpu.dot_dimension_numbers<[1], [0], [0], [1], [0, 0, 1, 1], [], []>} : vector<1x128xf32>, vector<128x512xf32>, vector<1x512xf32> -> vector<1x512xf32>
    %211 = arith.addf %209, %210 : vector<1x512xf32>
    %212 = vector.extract_strided_slice %211 {offsets = [0, 0], sizes = [1, 128], strides = [1, 1]} : vector<1x512xf32> to vector<1x128xf32>
    %213 = math.tanh %212 : vector<1x128xf32>
    %cst_58 = arith.constant 5.000000e-01 : f32
    %214 = vector.broadcast %cst_58 : f32 to vector<1x128xf32>
    %215 = arith.mulf %214, %213 : vector<1x128xf32>
    %cst_59 = arith.constant 5.000000e-01 : f32
    %216 = vector.broadcast %cst_59 : f32 to vector<1x128xf32>
    %217 = arith.addf %215, %216 : vector<1x128xf32>
    %218 = vector.extract_strided_slice %211 {offsets = [0, 128], sizes = [1, 128], strides = [1, 1]} : vector<1x512xf32> to vector<1x128xf32>
    %219 = math.tanh %218 : vector<1x128xf32>
    %cst_60 = arith.constant 5.000000e-01 : f32
    %220 = vector.broadcast %cst_60 : f32 to vector<1x128xf32>
    %221 = arith.mulf %220, %219 : vector<1x128xf32>
    %cst_61 = arith.constant 5.000000e-01 : f32
    %222 = vector.broadcast %cst_61 : f32 to vector<1x128xf32>
    %223 = arith.addf %221, %222 : vector<1x128xf32>
    %224 = vector.extract_strided_slice %211 {offsets = [0, 256], sizes = [1, 128], strides = [1, 1]} : vector<1x512xf32> to vector<1x128xf32>
    %225 = math.tanh %224 : vector<1x128xf32>
    %226 = vector.extract_strided_slice %211 {offsets = [0, 384], sizes = [1, 128], strides = [1, 1]} : vector<1x512xf32> to vector<1x128xf32>
    %227 = math.tanh %226 : vector<1x128xf32>
    %cst_62 = arith.constant 5.000000e-01 : f32
    %228 = vector.broadcast %cst_62 : f32 to vector<1x128xf32>
    %229 = arith.mulf %228, %227 : vector<1x128xf32>
    %cst_63 = arith.constant 5.000000e-01 : f32
    %230 = vector.broadcast %cst_63 : f32 to vector<1x128xf32>
    %231 = arith.addf %229, %230 : vector<1x128xf32>
    %232 = arith.mulf %223, %206 : vector<1x128xf32>
    %233 = arith.mulf %217, %225 : vector<1x128xf32>
    %234 = arith.addf %232, %233 : vector<1x128xf32>
    %235 = math.tanh %234 : vector<1x128xf32>
    %236 = arith.mulf %231, %235 : vector<1x128xf32>
    %c0_64 = arith.constant 0 : index
    %c0_65 = arith.constant 0 : index
    %237 = vector.load %arg5[%c0_64, %c0_65] : memref<128x256xbf16, #tpu.memory_space<vmem>>, vector<128x256xbf16>
    %238 = arith.extf %237 : vector<128x256xbf16> to vector<128x256xf32>
    %c0_66 = arith.constant 0 : index
    %c0_67 = arith.constant 0 : index
    %239 = vector.load %arg6[%c0_66, %c0_67] : memref<128x256xbf16, #tpu.memory_space<vmem>>, vector<128x256xbf16>
    %240 = arith.extf %239 : vector<128x256xbf16> to vector<128x256xf32>
    %cst_68 = arith.constant dense<0.000000e+00> : vector<1x256xf32>
    %241 = tpu.matmul %236, %238, %cst_68 {dimension_numbers = #tpu.dot_dimension_numbers<[1], [0], [0], [1], [0, 0, 1, 1], [], []>} : vector<1x128xf32>, vector<128x256xf32>, vector<1x256xf32> -> vector<1x256xf32>
    %c0_69 = arith.constant 0 : index
    %c0_70 = arith.constant 0 : index
    %242 = vector.load %arg7[%c0_69, %c0_70] : memref<1x256xf32, #tpu.memory_space<vmem>>, vector<1x256xf32>
    %243 = arith.addf %241, %242 : vector<1x256xf32>
    %244 = tpu.iota {dimensions = array<i32: 1>} : vector<1x128xi32>
    %c64_i32 = arith.constant 64 : i32
    %245 = vector.broadcast %c64_i32 : i32 to vector<1x128xi32>
    %246 = arith.cmpi slt, %244, %245 : vector<1x128xi32>
    %cst_71 = arith.constant 1.000000e+00 : f32
    %cst_72 = arith.constant 5.000000e-01 : f32
    %247 = vector.broadcast %cst_71 : f32 to vector<1x128xf32>
    %248 = vector.broadcast %cst_72 : f32 to vector<1x128xf32>
    %249 = arith.select %246, %247, %248 : vector<1x128xi1>, vector<1x128xf32>
    %cst_73 = arith.constant 0.000000e+00 : f32
    %cst_74 = arith.constant 5.000000e-01 : f32
    %250 = vector.broadcast %cst_73 : f32 to vector<1x128xf32>
    %251 = vector.broadcast %cst_74 : f32 to vector<1x128xf32>
    %252 = arith.select %246, %250, %251 : vector<1x128xi1>, vector<1x128xf32>
    %c0_75 = arith.constant 0 : index
    %c0_76 = arith.constant 0 : index
    %253 = vector.load %arg8[%c0_75, %c0_76] : memref<1x128xf32, #tpu.memory_space<vmem>>, vector<1x128xf32>
    %c0_77 = arith.constant 0 : index
    %c0_78 = arith.constant 0 : index
    %254 = vector.load %arg9[%c0_77, %c0_78] : memref<1x1xf32, #tpu.memory_space<vmem>>, vector<1x1xf32>
    %255 = tpu.iota {dimensions = array<i32: 1>} : vector<1x8xi32>
    %cst_79 = arith.constant 0.000000e+00 : f32
    %256 = vector.broadcast %cst_79 : f32 to vector<1x128xf32>
    %cst_80 = arith.constant 0.000000e+00 : f32
    %257 = vector.broadcast %cst_80 : f32 to vector<1x128xf32>
    %cst_81 = arith.constant 0.000000e+00 : f32
    %258 = vector.broadcast %cst_81 : f32 to vector<1x8xf32>
    %cst_82 = arith.constant dense<0.000000e+00> : vector<1x256xf32>
    %259 = tpu.matmul %256, %240, %cst_82 {dimension_numbers = #tpu.dot_dimension_numbers<[1], [0], [0], [1], [0, 0, 1, 1], [], []>} : vector<1x128xf32>, vector<128x256xf32>, vector<1x256xf32> -> vector<1x256xf32>
    %260 = arith.addf %243, %259 : vector<1x256xf32>
    %261 = vector.extract_strided_slice %260 {offsets = [0, 0], sizes = [1, 128], strides = [1, 1]} : vector<1x256xf32> to vector<1x128xf32>
    %262 = math.tanh %261 : vector<1x128xf32>
    %cst_83 = arith.constant 5.000000e-01 : f32
    %263 = vector.broadcast %cst_83 : f32 to vector<1x128xf32>
    %264 = arith.mulf %263, %262 : vector<1x128xf32>
    %cst_84 = arith.constant 5.000000e-01 : f32
    %265 = vector.broadcast %cst_84 : f32 to vector<1x128xf32>
    %266 = arith.addf %264, %265 : vector<1x128xf32>
    %267 = vector.extract_strided_slice %260 {offsets = [0, 128], sizes = [1, 128], strides = [1, 1]} : vector<1x256xf32> to vector<1x128xf32>
    %268 = math.tanh %267 : vector<1x128xf32>
    %269 = arith.mulf %249, %268 : vector<1x128xf32>
    %270 = arith.addf %269, %252 : vector<1x128xf32>
    %271 = arith.select %246, %270, %257 : vector<1x128xi1>, vector<1x128xf32>
    %272 = arith.mulf %266, %271 : vector<1x128xf32>
    %c64_i32_85 = arith.constant 64 : i32
    %273 = tpu.dynamic_rotate %272 by %c64_i32_85 dim 1 : vector<1x128xf32>, i32 -> vector<1x128xf32>
    %274 = arith.addf %272, %273 : vector<1x128xf32>
    %275 = math.tanh %274 : vector<1x128xf32>
    %276 = arith.mulf %270, %275 : vector<1x128xf32>
    %277 = arith.mulf %276, %253 : vector<1x128xf32>
    %cst_86 = arith.constant dense<0.000000e+00> : vector<1xf32>
    %278 = vector.multi_reduction <add>, %277, %cst_86 [1] : vector<1x128xf32> to vector<1xf32>
    %279 = vector.shape_cast %278 : vector<1xf32> to vector<1x1xf32>
    %c0_i32 = arith.constant 0 : i32
    %280 = vector.broadcast %c0_i32 : i32 to vector<1x8xi32>
    %281 = arith.cmpi eq, %255, %280 : vector<1x8xi32>
    %cst_87 = arith.constant 0.000000e+00 : f32
    %282 = vector.shape_cast %279 : vector<1x1xf32> to vector<1x1xf32>
    %283 = vector.broadcast %282 : vector<1x1xf32> to vector<1x8xf32>
    %284 = vector.broadcast %cst_87 : f32 to vector<1x8xf32>
    %285 = arith.select %281, %283, %284 : vector<1x8xi1>, vector<1x8xf32>
    %286 = arith.addf %258, %285 : vector<1x8xf32>
    %cst_88 = arith.constant dense<0.000000e+00> : vector<1x256xf32>
    %287 = tpu.matmul %276, %240, %cst_88 {dimension_numbers = #tpu.dot_dimension_numbers<[1], [0], [0], [1], [0, 0, 1, 1], [], []>} : vector<1x128xf32>, vector<128x256xf32>, vector<1x256xf32> -> vector<1x256xf32>
    %288 = arith.addf %243, %287 : vector<1x256xf32>
    %289 = vector.extract_strided_slice %288 {offsets = [0, 0], sizes = [1, 128], strides = [1, 1]} : vector<1x256xf32> to vector<1x128xf32>
    %290 = math.tanh %289 : vector<1x128xf32>
    %cst_89 = arith.constant 5.000000e-01 : f32
    %291 = vector.broadcast %cst_89 : f32 to vector<1x128xf32>
    %292 = arith.mulf %291, %290 : vector<1x128xf32>
    %cst_90 = arith.constant 5.000000e-01 : f32
    %293 = vector.broadcast %cst_90 : f32 to vector<1x128xf32>
    %294 = arith.addf %292, %293 : vector<1x128xf32>
    %295 = vector.extract_strided_slice %288 {offsets = [0, 128], sizes = [1, 128], strides = [1, 1]} : vector<1x256xf32> to vector<1x128xf32>
    %296 = math.tanh %295 : vector<1x128xf32>
    %297 = arith.mulf %249, %296 : vector<1x128xf32>
    %298 = arith.addf %297, %252 : vector<1x128xf32>
    %299 = arith.select %246, %298, %274 : vector<1x128xi1>, vector<1x128xf32>
    %300 = arith.mulf %294, %299 : vector<1x128xf32>
    %c64_i32_91 = arith.constant 64 : i32
    %301 = tpu.dynamic_rotate %300 by %c64_i32_91 dim 1 : vector<1x128xf32>, i32 -> vector<1x128xf32>
    %302 = arith.addf %300, %301 : vector<1x128xf32>
    %303 = math.tanh %302 : vector<1x128xf32>
    %304 = arith.mulf %298, %303 : vector<1x128xf32>
    %305 = arith.mulf %304, %253 : vector<1x128xf32>
    %cst_92 = arith.constant dense<0.000000e+00> : vector<1xf32>
    %306 = vector.multi_reduction <add>, %305, %cst_92 [1] : vector<1x128xf32> to vector<1xf32>
    %307 = vector.shape_cast %306 : vector<1xf32> to vector<1x1xf32>
    %c1_i32 = arith.constant 1 : i32
    %308 = vector.broadcast %c1_i32 : i32 to vector<1x8xi32>
    %309 = arith.cmpi eq, %255, %308 : vector<1x8xi32>
    %cst_93 = arith.constant 0.000000e+00 : f32
    %310 = vector.shape_cast %307 : vector<1x1xf32> to vector<1x1xf32>
    %311 = vector.broadcast %310 : vector<1x1xf32> to vector<1x8xf32>
    %312 = vector.broadcast %cst_93 : f32 to vector<1x8xf32>
    %313 = arith.select %309, %311, %312 : vector<1x8xi1>, vector<1x8xf32>
    %314 = arith.addf %286, %313 : vector<1x8xf32>
    %cst_94 = arith.constant dense<0.000000e+00> : vector<1x256xf32>
    %315 = tpu.matmul %304, %240, %cst_94 {dimension_numbers = #tpu.dot_dimension_numbers<[1], [0], [0], [1], [0, 0, 1, 1], [], []>} : vector<1x128xf32>, vector<128x256xf32>, vector<1x256xf32> -> vector<1x256xf32>
    %316 = arith.addf %243, %315 : vector<1x256xf32>
    %317 = vector.extract_strided_slice %316 {offsets = [0, 0], sizes = [1, 128], strides = [1, 1]} : vector<1x256xf32> to vector<1x128xf32>
    %318 = math.tanh %317 : vector<1x128xf32>
    %cst_95 = arith.constant 5.000000e-01 : f32
    %319 = vector.broadcast %cst_95 : f32 to vector<1x128xf32>
    %320 = arith.mulf %319, %318 : vector<1x128xf32>
    %cst_96 = arith.constant 5.000000e-01 : f32
    %321 = vector.broadcast %cst_96 : f32 to vector<1x128xf32>
    %322 = arith.addf %320, %321 : vector<1x128xf32>
    %323 = vector.extract_strided_slice %316 {offsets = [0, 128], sizes = [1, 128], strides = [1, 1]} : vector<1x256xf32> to vector<1x128xf32>
    %324 = math.tanh %323 : vector<1x128xf32>
    %325 = arith.mulf %249, %324 : vector<1x128xf32>
    %326 = arith.addf %325, %252 : vector<1x128xf32>
    %327 = arith.select %246, %326, %302 : vector<1x128xi1>, vector<1x128xf32>
    %328 = arith.mulf %322, %327 : vector<1x128xf32>
    %c64_i32_97 = arith.constant 64 : i32
    %329 = tpu.dynamic_rotate %328 by %c64_i32_97 dim 1 : vector<1x128xf32>, i32 -> vector<1x128xf32>
    %330 = arith.addf %328, %329 : vector<1x128xf32>
    %331 = math.tanh %330 : vector<1x128xf32>
    %332 = arith.mulf %326, %331 : vector<1x128xf32>
    %333 = arith.mulf %332, %253 : vector<1x128xf32>
    %cst_98 = arith.constant dense<0.000000e+00> : vector<1xf32>
    %334 = vector.multi_reduction <add>, %333, %cst_98 [1] : vector<1x128xf32> to vector<1xf32>
    %335 = vector.shape_cast %334 : vector<1xf32> to vector<1x1xf32>
    %c2_i32 = arith.constant 2 : i32
    %336 = vector.broadcast %c2_i32 : i32 to vector<1x8xi32>
    %337 = arith.cmpi eq, %255, %336 : vector<1x8xi32>
    %cst_99 = arith.constant 0.000000e+00 : f32
    %338 = vector.shape_cast %335 : vector<1x1xf32> to vector<1x1xf32>
    %339 = vector.broadcast %338 : vector<1x1xf32> to vector<1x8xf32>
    %340 = vector.broadcast %cst_99 : f32 to vector<1x8xf32>
    %341 = arith.select %337, %339, %340 : vector<1x8xi1>, vector<1x8xf32>
    %342 = arith.addf %314, %341 : vector<1x8xf32>
    %cst_100 = arith.constant dense<0.000000e+00> : vector<1x256xf32>
    %343 = tpu.matmul %332, %240, %cst_100 {dimension_numbers = #tpu.dot_dimension_numbers<[1], [0], [0], [1], [0, 0, 1, 1], [], []>} : vector<1x128xf32>, vector<128x256xf32>, vector<1x256xf32> -> vector<1x256xf32>
    %344 = arith.addf %243, %343 : vector<1x256xf32>
    %345 = vector.extract_strided_slice %344 {offsets = [0, 0], sizes = [1, 128], strides = [1, 1]} : vector<1x256xf32> to vector<1x128xf32>
    %346 = math.tanh %345 : vector<1x128xf32>
    %cst_101 = arith.constant 5.000000e-01 : f32
    %347 = vector.broadcast %cst_101 : f32 to vector<1x128xf32>
    %348 = arith.mulf %347, %346 : vector<1x128xf32>
    %cst_102 = arith.constant 5.000000e-01 : f32
    %349 = vector.broadcast %cst_102 : f32 to vector<1x128xf32>
    %350 = arith.addf %348, %349 : vector<1x128xf32>
    %351 = vector.extract_strided_slice %344 {offsets = [0, 128], sizes = [1, 128], strides = [1, 1]} : vector<1x256xf32> to vector<1x128xf32>
    %352 = math.tanh %351 : vector<1x128xf32>
    %353 = arith.mulf %249, %352 : vector<1x128xf32>
    %354 = arith.addf %353, %252 : vector<1x128xf32>
    %355 = arith.select %246, %354, %330 : vector<1x128xi1>, vector<1x128xf32>
    %356 = arith.mulf %350, %355 : vector<1x128xf32>
    %c64_i32_103 = arith.constant 64 : i32
    %357 = tpu.dynamic_rotate %356 by %c64_i32_103 dim 1 : vector<1x128xf32>, i32 -> vector<1x128xf32>
    %358 = arith.addf %356, %357 : vector<1x128xf32>
    %359 = math.tanh %358 : vector<1x128xf32>
    %360 = arith.mulf %354, %359 : vector<1x128xf32>
    %361 = arith.mulf %360, %253 : vector<1x128xf32>
    %cst_104 = arith.constant dense<0.000000e+00> : vector<1xf32>
    %362 = vector.multi_reduction <add>, %361, %cst_104 [1] : vector<1x128xf32> to vector<1xf32>
    %363 = vector.shape_cast %362 : vector<1xf32> to vector<1x1xf32>
    %c3_i32 = arith.constant 3 : i32
    %364 = vector.broadcast %c3_i32 : i32 to vector<1x8xi32>
    %365 = arith.cmpi eq, %255, %364 : vector<1x8xi32>
    %cst_105 = arith.constant 0.000000e+00 : f32
    %366 = vector.shape_cast %363 : vector<1x1xf32> to vector<1x1xf32>
    %367 = vector.broadcast %366 : vector<1x1xf32> to vector<1x8xf32>
    %368 = vector.broadcast %cst_105 : f32 to vector<1x8xf32>
    %369 = arith.select %365, %367, %368 : vector<1x8xi1>, vector<1x8xf32>
    %370 = arith.addf %342, %369 : vector<1x8xf32>
    %cst_106 = arith.constant dense<0.000000e+00> : vector<1x256xf32>
    %371 = tpu.matmul %360, %240, %cst_106 {dimension_numbers = #tpu.dot_dimension_numbers<[1], [0], [0], [1], [0, 0, 1, 1], [], []>} : vector<1x128xf32>, vector<128x256xf32>, vector<1x256xf32> -> vector<1x256xf32>
    %372 = arith.addf %243, %371 : vector<1x256xf32>
    %373 = vector.extract_strided_slice %372 {offsets = [0, 0], sizes = [1, 128], strides = [1, 1]} : vector<1x256xf32> to vector<1x128xf32>
    %374 = math.tanh %373 : vector<1x128xf32>
    %cst_107 = arith.constant 5.000000e-01 : f32
    %375 = vector.broadcast %cst_107 : f32 to vector<1x128xf32>
    %376 = arith.mulf %375, %374 : vector<1x128xf32>
    %cst_108 = arith.constant 5.000000e-01 : f32
    %377 = vector.broadcast %cst_108 : f32 to vector<1x128xf32>
    %378 = arith.addf %376, %377 : vector<1x128xf32>
    %379 = vector.extract_strided_slice %372 {offsets = [0, 128], sizes = [1, 128], strides = [1, 1]} : vector<1x256xf32> to vector<1x128xf32>
    %380 = math.tanh %379 : vector<1x128xf32>
    %381 = arith.mulf %249, %380 : vector<1x128xf32>
    %382 = arith.addf %381, %252 : vector<1x128xf32>
    %383 = arith.select %246, %382, %358 : vector<1x128xi1>, vector<1x128xf32>
    %384 = arith.mulf %378, %383 : vector<1x128xf32>
    %c64_i32_109 = arith.constant 64 : i32
    %385 = tpu.dynamic_rotate %384 by %c64_i32_109 dim 1 : vector<1x128xf32>, i32 -> vector<1x128xf32>
    %386 = arith.addf %384, %385 : vector<1x128xf32>
    %387 = math.tanh %386 : vector<1x128xf32>
    %388 = arith.mulf %382, %387 : vector<1x128xf32>
    %389 = arith.mulf %388, %253 : vector<1x128xf32>
    %cst_110 = arith.constant dense<0.000000e+00> : vector<1xf32>
    %390 = vector.multi_reduction <add>, %389, %cst_110 [1] : vector<1x128xf32> to vector<1xf32>
    %391 = vector.shape_cast %390 : vector<1xf32> to vector<1x1xf32>
    %c4_i32 = arith.constant 4 : i32
    %392 = vector.broadcast %c4_i32 : i32 to vector<1x8xi32>
    %393 = arith.cmpi eq, %255, %392 : vector<1x8xi32>
    %cst_111 = arith.constant 0.000000e+00 : f32
    %394 = vector.shape_cast %391 : vector<1x1xf32> to vector<1x1xf32>
    %395 = vector.broadcast %394 : vector<1x1xf32> to vector<1x8xf32>
    %396 = vector.broadcast %cst_111 : f32 to vector<1x8xf32>
    %397 = arith.select %393, %395, %396 : vector<1x8xi1>, vector<1x8xf32>
    %398 = arith.addf %370, %397 : vector<1x8xf32>
    %cst_112 = arith.constant dense<0.000000e+00> : vector<1x256xf32>
    %399 = tpu.matmul %388, %240, %cst_112 {dimension_numbers = #tpu.dot_dimension_numbers<[1], [0], [0], [1], [0, 0, 1, 1], [], []>} : vector<1x128xf32>, vector<128x256xf32>, vector<1x256xf32> -> vector<1x256xf32>
    %400 = arith.addf %243, %399 : vector<1x256xf32>
    %401 = vector.extract_strided_slice %400 {offsets = [0, 0], sizes = [1, 128], strides = [1, 1]} : vector<1x256xf32> to vector<1x128xf32>
    %402 = math.tanh %401 : vector<1x128xf32>
    %cst_113 = arith.constant 5.000000e-01 : f32
    %403 = vector.broadcast %cst_113 : f32 to vector<1x128xf32>
    %404 = arith.mulf %403, %402 : vector<1x128xf32>
    %cst_114 = arith.constant 5.000000e-01 : f32
    %405 = vector.broadcast %cst_114 : f32 to vector<1x128xf32>
    %406 = arith.addf %404, %405 : vector<1x128xf32>
    %407 = vector.extract_strided_slice %400 {offsets = [0, 128], sizes = [1, 128], strides = [1, 1]} : vector<1x256xf32> to vector<1x128xf32>
    %408 = math.tanh %407 : vector<1x128xf32>
    %409 = arith.mulf %249, %408 : vector<1x128xf32>
    %410 = arith.addf %409, %252 : vector<1x128xf32>
    %411 = arith.select %246, %410, %386 : vector<1x128xi1>, vector<1x128xf32>
    %412 = arith.mulf %406, %411 : vector<1x128xf32>
    %c64_i32_115 = arith.constant 64 : i32
    %413 = tpu.dynamic_rotate %412 by %c64_i32_115 dim 1 : vector<1x128xf32>, i32 -> vector<1x128xf32>
    %414 = arith.addf %412, %413 : vector<1x128xf32>
    %415 = math.tanh %414 : vector<1x128xf32>
    %416 = arith.mulf %410, %415 : vector<1x128xf32>
    %417 = arith.mulf %416, %253 : vector<1x128xf32>
    %cst_116 = arith.constant dense<0.000000e+00> : vector<1xf32>
    %418 = vector.multi_reduction <add>, %417, %cst_116 [1] : vector<1x128xf32> to vector<1xf32>
    %419 = vector.shape_cast %418 : vector<1xf32> to vector<1x1xf32>
    %c5_i32 = arith.constant 5 : i32
    %420 = vector.broadcast %c5_i32 : i32 to vector<1x8xi32>
    %421 = arith.cmpi eq, %255, %420 : vector<1x8xi32>
    %cst_117 = arith.constant 0.000000e+00 : f32
    %422 = vector.shape_cast %419 : vector<1x1xf32> to vector<1x1xf32>
    %423 = vector.broadcast %422 : vector<1x1xf32> to vector<1x8xf32>
    %424 = vector.broadcast %cst_117 : f32 to vector<1x8xf32>
    %425 = arith.select %421, %423, %424 : vector<1x8xi1>, vector<1x8xf32>
    %426 = arith.addf %398, %425 : vector<1x8xf32>
    %cst_118 = arith.constant dense<0.000000e+00> : vector<1x256xf32>
    %427 = tpu.matmul %416, %240, %cst_118 {dimension_numbers = #tpu.dot_dimension_numbers<[1], [0], [0], [1], [0, 0, 1, 1], [], []>} : vector<1x128xf32>, vector<128x256xf32>, vector<1x256xf32> -> vector<1x256xf32>
    %428 = arith.addf %243, %427 : vector<1x256xf32>
    %429 = vector.extract_strided_slice %428 {offsets = [0, 0], sizes = [1, 128], strides = [1, 1]} : vector<1x256xf32> to vector<1x128xf32>
    %430 = math.tanh %429 : vector<1x128xf32>
    %cst_119 = arith.constant 5.000000e-01 : f32
    %431 = vector.broadcast %cst_119 : f32 to vector<1x128xf32>
    %432 = arith.mulf %431, %430 : vector<1x128xf32>
    %cst_120 = arith.constant 5.000000e-01 : f32
    %433 = vector.broadcast %cst_120 : f32 to vector<1x128xf32>
    %434 = arith.addf %432, %433 : vector<1x128xf32>
    %435 = vector.extract_strided_slice %428 {offsets = [0, 128], sizes = [1, 128], strides = [1, 1]} : vector<1x256xf32> to vector<1x128xf32>
    %436 = math.tanh %435 : vector<1x128xf32>
    %437 = arith.mulf %249, %436 : vector<1x128xf32>
    %438 = arith.addf %437, %252 : vector<1x128xf32>
    %439 = arith.select %246, %438, %414 : vector<1x128xi1>, vector<1x128xf32>
    %440 = arith.mulf %434, %439 : vector<1x128xf32>
    %c64_i32_121 = arith.constant 64 : i32
    %441 = tpu.dynamic_rotate %440 by %c64_i32_121 dim 1 : vector<1x128xf32>, i32 -> vector<1x128xf32>
    %442 = arith.addf %440, %441 : vector<1x128xf32>
    %443 = math.tanh %442 : vector<1x128xf32>
    %444 = arith.mulf %438, %443 : vector<1x128xf32>
    %445 = arith.mulf %444, %253 : vector<1x128xf32>
    %cst_122 = arith.constant dense<0.000000e+00> : vector<1xf32>
    %446 = vector.multi_reduction <add>, %445, %cst_122 [1] : vector<1x128xf32> to vector<1xf32>
    %447 = vector.shape_cast %446 : vector<1xf32> to vector<1x1xf32>
    %c6_i32 = arith.constant 6 : i32
    %448 = vector.broadcast %c6_i32 : i32 to vector<1x8xi32>
    %449 = arith.cmpi eq, %255, %448 : vector<1x8xi32>
    %cst_123 = arith.constant 0.000000e+00 : f32
    %450 = vector.shape_cast %447 : vector<1x1xf32> to vector<1x1xf32>
    %451 = vector.broadcast %450 : vector<1x1xf32> to vector<1x8xf32>
    %452 = vector.broadcast %cst_123 : f32 to vector<1x8xf32>
    %453 = arith.select %449, %451, %452 : vector<1x8xi1>, vector<1x8xf32>
    %454 = arith.addf %426, %453 : vector<1x8xf32>
    %cst_124 = arith.constant dense<0.000000e+00> : vector<1x256xf32>
    %455 = tpu.matmul %444, %240, %cst_124 {dimension_numbers = #tpu.dot_dimension_numbers<[1], [0], [0], [1], [0, 0, 1, 1], [], []>} : vector<1x128xf32>, vector<128x256xf32>, vector<1x256xf32> -> vector<1x256xf32>
    %456 = arith.addf %243, %455 : vector<1x256xf32>
    %457 = vector.extract_strided_slice %456 {offsets = [0, 0], sizes = [1, 128], strides = [1, 1]} : vector<1x256xf32> to vector<1x128xf32>
    %458 = math.tanh %457 : vector<1x128xf32>
    %cst_125 = arith.constant 5.000000e-01 : f32
    %459 = vector.broadcast %cst_125 : f32 to vector<1x128xf32>
    %460 = arith.mulf %459, %458 : vector<1x128xf32>
    %cst_126 = arith.constant 5.000000e-01 : f32
    %461 = vector.broadcast %cst_126 : f32 to vector<1x128xf32>
    %462 = arith.addf %460, %461 : vector<1x128xf32>
    %463 = vector.extract_strided_slice %456 {offsets = [0, 128], sizes = [1, 128], strides = [1, 1]} : vector<1x256xf32> to vector<1x128xf32>
    %464 = math.tanh %463 : vector<1x128xf32>
    %465 = arith.mulf %249, %464 : vector<1x128xf32>
    %466 = arith.addf %465, %252 : vector<1x128xf32>
    %467 = arith.select %246, %466, %442 : vector<1x128xi1>, vector<1x128xf32>
    %468 = arith.mulf %462, %467 : vector<1x128xf32>
    %c64_i32_127 = arith.constant 64 : i32
    %469 = tpu.dynamic_rotate %468 by %c64_i32_127 dim 1 : vector<1x128xf32>, i32 -> vector<1x128xf32>
    %470 = arith.addf %468, %469 : vector<1x128xf32>
    %471 = math.tanh %470 : vector<1x128xf32>
    %472 = arith.mulf %466, %471 : vector<1x128xf32>
    %473 = arith.mulf %472, %253 : vector<1x128xf32>
    %cst_128 = arith.constant dense<0.000000e+00> : vector<1xf32>
    %474 = vector.multi_reduction <add>, %473, %cst_128 [1] : vector<1x128xf32> to vector<1xf32>
    %475 = vector.shape_cast %474 : vector<1xf32> to vector<1x1xf32>
    %c7_i32 = arith.constant 7 : i32
    %476 = vector.broadcast %c7_i32 : i32 to vector<1x8xi32>
    %477 = arith.cmpi eq, %255, %476 : vector<1x8xi32>
    %cst_129 = arith.constant 0.000000e+00 : f32
    %478 = vector.shape_cast %475 : vector<1x1xf32> to vector<1x1xf32>
    %479 = vector.broadcast %478 : vector<1x1xf32> to vector<1x8xf32>
    %480 = vector.broadcast %cst_129 : f32 to vector<1x8xf32>
    %481 = arith.select %477, %479, %480 : vector<1x8xi1>, vector<1x8xf32>
    %482 = arith.addf %454, %481 : vector<1x8xf32>
    %483 = vector.broadcast %254 : vector<1x1xf32> to vector<1x8xf32>
    %484 = arith.addf %482, %483 : vector<1x8xf32>
    %c0_130 = arith.constant 0 : index
    %c0_131 = arith.constant 0 : index
    %485 = vector.load %arg10[%c0_130, %c0_131] : memref<1x8xf32, #tpu.memory_space<vmem>>, vector<1x8xf32>
    tpu.vector_store %arg10[%c0_130, %c0_131], %484 {strides = array<i32>} : memref<1x8xf32, #tpu.memory_space<vmem>>, vector<1x8xf32>,
    return
  }
  func.func @transform_0(%arg0: i32) -> (i32, i32) {
    %c0_i32 = arith.constant 0 : i32
    %c0_i32_0 = arith.constant 0 : i32
    %c0_i32_1 = arith.constant 0 : i32
    return %c0_i32, %c0_i32_0 : i32, i32
  }
  func.func @transform_1(%arg0: i32) -> (i32, i32) {
    %c0_i32 = arith.constant 0 : i32
    %c0_i32_0 = arith.constant 0 : i32
    %c0_i32_1 = arith.constant 0 : i32
    return %c0_i32, %c0_i32_0 : i32, i32
  }
  func.func @transform_2(%arg0: i32) -> (i32, i32) {
    %c0_i32 = arith.constant 0 : i32
    %c0_i32_0 = arith.constant 0 : i32
    %c0_i32_1 = arith.constant 0 : i32
    return %c0_i32, %c0_i32_0 : i32, i32
  }
  func.func @transform_3(%arg0: i32) -> (i32, i32) {
    %c0_i32 = arith.constant 0 : i32
    %c0_i32_0 = arith.constant 0 : i32
    %c0_i32_1 = arith.constant 0 : i32
    return %c0_i32, %c0_i32_0 : i32, i32
  }
  func.func @transform_4(%arg0: i32) -> (i32, i32) {
    %c0_i32 = arith.constant 0 : i32
    %c0_i32_0 = arith.constant 0 : i32
    %c0_i32_1 = arith.constant 0 : i32
    return %c0_i32, %c0_i32_0 : i32, i32
  }
  func.func @transform_5(%arg0: i32) -> (i32, i32) {
    %c0_i32 = arith.constant 0 : i32
    %c0_i32_0 = arith.constant 0 : i32
    %c0_i32_1 = arith.constant 0 : i32
    return %c0_i32, %c0_i32_0 : i32, i32
  }
  func.func @transform_6(%arg0: i32) -> (i32, i32) {
    %c0_i32 = arith.constant 0 : i32
    %c0_i32_0 = arith.constant 0 : i32
    %c0_i32_1 = arith.constant 0 : i32
    return %c0_i32, %c0_i32_0 : i32, i32
  }
  func.func @transform_7(%arg0: i32) -> (i32, i32) {
    %c0_i32 = arith.constant 0 : i32
    %c0_i32_0 = arith.constant 0 : i32
    %c0_i32_1 = arith.constant 0 : i32
    return %c0_i32, %c0_i32_0 : i32, i32
  }
  func.func @transform_8(%arg0: i32) -> (i32, i32) {
    %c0_i32 = arith.constant 0 : i32
    %c0_i32_0 = arith.constant 0 : i32
    %c0_i32_1 = arith.constant 0 : i32
    return %c0_i32, %c0_i32_0 : i32, i32
  }
  func.func @transform_9(%arg0: i32) -> (i32, i32) {
    %c0_i32 = arith.constant 0 : i32
    %c0_i32_0 = arith.constant 0 : i32
    %c0_i32_1 = arith.constant 0 : i32
    return %c0_i32, %c0_i32_0 : i32, i32
  }
}

</mosaic_0001>

<llo_original>
// kernel: tpu_custom_call.1
$region0: #{tpu_custom_call.1}
  #allocation0 [shape = 'u32[]', space=smem, size = 0x4, offset = 0x4, fixed_abs, tag = 'smem constant byte address 0x4 - core index']
  #allocation1 [shape = 'u32[72,128]{1,0:T(1,128)}', space=vmem, size = 0x9000, scoped, tag = 'internal scratch']
  #allocation2 [shape = 'f32[1,1]{1,0:T(1,128)S(1)}', space=vmem, size = 0x200, scoped, tag = 'scoped memory for tpu_custom_call.1']
  %s0 = inlined_call_operand.vmem [shape: f32[8,1], index: 0, kind: input, shape index: {}]
  %s1 = inlined_call_operand.vmem [shape: bf16[1,512], index: 1, kind: input, shape index: {}]
  %s2 = inlined_call_operand.hbm [shape: bf16[128,512], index: 2, kind: input, shape index: {}]
  %s3 = inlined_call_operand.vmem [shape: f32[1,512], index: 3, kind: input, shape index: {}]
  %s4 = inlined_call_operand.hbm [shape: bf16[128,256], index: 4, kind: input, shape index: {}]
  %s5 = inlined_call_operand.hbm [shape: bf16[128,256], index: 5, kind: input, shape index: {}]
  %s6 = inlined_call_operand.vmem [shape: f32[1,256], index: 6, kind: input, shape index: {}]
  %s7 = inlined_call_operand.vmem [shape: f32[1,128], index: 7, kind: input, shape index: {}]
  %s8 = inlined_call_operand.<no memory space> [shape: f32[1,1], index: 8, kind: input, shape index: {}]
  %s9 = inlined_call_operand.hbm [shape: f32[1,8], index: 9, kind: output, shape index: {}]
  %s10 = sld [smem:[#allocation0]]
  $region58: #{tpu_custom_call.1} parent=0
    _
  %s12 = ssub.s32 1, %s10
  %s13 = scalar_select 0, %s12, %s10
  %v14 = vstv %s8
  %15 = vst [vmem:[#allocation2] sm:$0x1] %v14
  $region1: #{tpu_custom_call.1} parent=0
    #allocation3 [shape = 'u8[131072]{0}', space=vmem, size = 0x20000, scoped, tag = 'input window, operand 2, single buffered']
    #allocation4 [shape = 's32[1]{0}', space=sflag, size = 0x4, scoped, tag = 'scoped memory for tpu_custom_call.1']
    #allocation5 [shape = 's32[1]{0}', space=sflag, size = 0x4, scoped, tag = 'scoped memory for tpu_custom_call.1']
    #allocation6 [shape = 'u8[65536]{0}', space=vmem, size = 0x10000, scoped, tag = 'input window, operand 4, single buffered']
    #allocation7 [shape = 's32[1]{0}', space=sflag, size = 0x4, scoped, tag = 'scoped memory for tpu_custom_call.1']
    #allocation8 [shape = 'u8[65536]{0}', space=vmem, size = 0x10000, scoped, tag = 'input window, operand 5, single buffered']
    #allocation9 [shape = 'u8[512]{0}', space=vmem, size = 0x400, scoped, tag = 'output window, operand 0, single buffered']
    %16 = vsyncpa [#allocation4], 0
    %17 = vsyncpa [#allocation7], 0
    %18 = vsyncpa [#allocation5], 0
    // Predicated region
    $region2: #{tpu_custom_call.1} parent=1 // pred_check
      _
    $region3: #{tpu_custom_call.1} parent=1 // pred_check_branch
      %20 = sbr.rel (0) target = $region5
    $region4: #{tpu_custom_call.1} parent=1 // pred_region
      _
    $region5: #{tpu_custom_call.1} parent=1 // pred_fallthru
      _
    // Predicated region
    $region6: #{tpu_custom_call.1} parent=1 // pred_check
      _
    $region7: #{tpu_custom_call.1} parent=1 // pred_check_branch
      %22 = sbr.rel (0) target = $region9
    $region8: #{tpu_custom_call.1} parent=1 // pred_region
      _
    $region9: #{tpu_custom_call.1} parent=1 // pred_fallthru
      _
    // Predicated region
    $region10: #{tpu_custom_call.1} parent=1 // pred_check
      _
    $region11: #{tpu_custom_call.1} parent=1 // pred_check_branch
      %24 = sbr.rel (0) target = $region13
    $region12: #{tpu_custom_call.1} parent=1 // pred_region
      %26 = vsyncadd [#allocation4], 0
      %s27 = sshll.u32 %s2, 4
      %s28 = int_to_ptr.hbm [resolvable:$true] %s27
      %s29 = sshll.u32 [#allocation3], 4
      %s30 = int_to_ptr.vmem [resolvable:$true] %s29
      %35 = dma.hbm_to_vmem [thread:$0]  %s28, 4096, %s30, [#allocation4], 256, 256, 16
    $region13: #{tpu_custom_call.1} parent=1 // pred_fallthru
      _
    // Predicated region
    $region14: #{tpu_custom_call.1} parent=1 // pred_check
      _
    $region15: #{tpu_custom_call.1} parent=1 // pred_check_branch
      %37 = sbr.rel (0) target = $region17
    $region16: #{tpu_custom_call.1} parent=1 // pred_region
      _
    $region17: #{tpu_custom_call.1} parent=1 // pred_fallthru
      _
    // Predicated region
    $region18: #{tpu_custom_call.1} parent=1 // pred_check
      _
    $region19: #{tpu_custom_call.1} parent=1 // pred_check_branch
      %39 = sbr.rel (0) target = $region21
    $region20: #{tpu_custom_call.1} parent=1 // pred_region
      %41 = vsyncadd [#allocation7], 0
      %s42 = sshll.u32 %s4, 4
      %s43 = int_to_ptr.hbm [resolvable:$true] %s42
      %s44 = sshll.u32 [#allocation6], 4
      %s45 = int_to_ptr.vmem [resolvable:$true] %s44
      %50 = dma.hbm_to_vmem [thread:$0]  %s43, 2048, %s45, [#allocation7], 128, 128, 8
    $region21: #{tpu_custom_call.1} parent=1 // pred_fallthru
      _
    // Predicated region
    $region22: #{tpu_custom_call.1} parent=1 // pred_check
      _
    $region23: #{tpu_custom_call.1} parent=1 // pred_check_branch
      %52 = sbr.rel (0) target = $region25
    $region24: #{tpu_custom_call.1} parent=1 // pred_region
      %54 = vsyncadd [#allocation7], 0
      %s55 = sshll.u32 %s5, 4
      %s56 = int_to_ptr.hbm [resolvable:$true] %s55
      %s57 = sshll.u32 [#allocation8], 4
      %s58 = int_to_ptr.vmem [resolvable:$true] %s57
      %63 = dma.hbm_to_vmem [thread:$0]  %s56, 2048, %s58, [#allocation7], 128, 128, 8
    $region25: #{tpu_custom_call.1} parent=1 // pred_fallthru
      _
    // Predicated region
    $region26: #{tpu_custom_call.1} parent=1 // pred_check
      _
    $region27: #{tpu_custom_call.1} parent=1 // pred_check_branch
      %65 = sbr.rel (0) target = $region29
    $region28: #{tpu_custom_call.1} parent=1 // pred_region
      _
    $region29: #{tpu_custom_call.1} parent=1 // pred_fallthru
      _
    // Predicated region
    $region30: #{tpu_custom_call.1} parent=1 // pred_check
      _
    $region31: #{tpu_custom_call.1} parent=1 // pred_check_branch
      %67 = sbr.rel (0) target = $region33
    $region32: #{tpu_custom_call.1} parent=1 // pred_region
      _
    $region33: #{tpu_custom_call.1} parent=1 // pred_fallthru
      _
    // Predicated region
    $region34: #{tpu_custom_call.1} parent=1 // pred_check
      _
    $region35: #{tpu_custom_call.1} parent=1 // pred_check_branch
      %69 = sbr.rel (0) target = $region37
    $region36: #{tpu_custom_call.1} parent=1 // pred_region
      _
    $region37: #{tpu_custom_call.1} parent=1 // pred_fallthru
      _
    // Predicated region
    $region38: #{tpu_custom_call.1} parent=1 // pred_check
      _
    $region39: #{tpu_custom_call.1} parent=1 // pred_check_branch
      %71 = sbr.rel (0) target = $region41
    $region40: #{tpu_custom_call.1} parent=1 // pred_region
      %73 = dma.done [#allocation4], 4096
    $region41: #{tpu_custom_call.1} parent=1 // pred_fallthru
      _
    // Predicated region
    $region42: #{tpu_custom_call.1} parent=1 // pred_check
      _
    $region43: #{tpu_custom_call.1} parent=1 // pred_check_branch
      %75 = sbr.rel (0) target = $region45
    $region44: #{tpu_custom_call.1} parent=1 // pred_region
      %77 = dma.done [#allocation7], 2048
    $region45: #{tpu_custom_call.1} parent=1 // pred_fallthru
      _
    // Predicated region
    $region46: #{tpu_custom_call.1} parent=1 // pred_check
      _
    $region47: #{tpu_custom_call.1} parent=1 // pred_check_branch
      %79 = sbr.rel (0) target = $region49
    $region48: #{tpu_custom_call.1} parent=1 // pred_region
      %81 = dma.done [#allocation7], 2048
    $region49: #{tpu_custom_call.1} parent=1 // pred_fallthru
      _
    %v82 = vld [vmem:[%s1] sm:$0xf]
    %v83 = vunpack.c.l.bf16 %v82
    %v84 = vld [vmem:[#allocation3] sm:$0xff]
    %v85 = vld [vmem:[#allocation3 + $0x8] sm:$0xff]
    %v86 = vld [vmem:[#allocation3 + $0x10] sm:$0xff]
    %v87 = vld [vmem:[#allocation3 + $0x18] sm:$0xff]
    %v88 = vld [vmem:[#allocation3 + $0x20] sm:$0xff]
    %v89 = vld [vmem:[#allocation3 + $0x28] sm:$0xff]
    %v90 = vld [vmem:[#allocation3 + $0x30] sm:$0xff]
    %v91 = vld [vmem:[#allocation3 + $0x38] sm:$0xff]
    %v92 = vld [vmem:[#allocation3 + $0x40] sm:$0xff]
    %v93 = vld [vmem:[#allocation3 + $0x48] sm:$0xff]
    %v94 = vld [vmem:[#allocation3 + $0x50] sm:$0xff]
    %v95 = vld [vmem:[#allocation3 + $0x58] sm:$0xff]
    %v96 = vld [vmem:[#allocation3 + $0x60] sm:$0xff]
    %v97 = vld [vmem:[#allocation3 + $0x68] sm:$0xff]
    %v98 = vld [vmem:[#allocation3 + $0x70] sm:$0xff]
    %v99 = vld [vmem:[#allocation3 + $0x78] sm:$0xff]
    %v100 = vld [vmem:[#allocation3 + $0x80] sm:$0xff]
    %v101 = vld [vmem:[#allocation3 + $0x88] sm:$0xff]
    %v102 = vld [vmem:[#allocation3 + $0x90] sm:$0xff]
    %v103 = vld [vmem:[#allocation3 + $0x98] sm:$0xff]
    %v104 = vld [vmem:[#allocation3 + $0xa0] sm:$0xff]
    %v105 = vld [vmem:[#allocation3 + $0xa8] sm:$0xff]
    %v106 = vld [vmem:[#allocation3 + $0xb0] sm:$0xff]
    %v107 = vld [vmem:[#allocation3 + $0xb8] sm:$0xff]
    %v108 = vld [vmem:[#allocation3 + $0xc0] sm:$0xff]
    %v109 = vld [vmem:[#allocation3 + $0xc8] sm:$0xff]
    %v110 = vld [vmem:[#allocation3 + $0xd0] sm:$0xff]
    %v111 = vld [vmem:[#allocation3 + $0xd8] sm:$0xff]
    %v112 = vld [vmem:[#allocation3 + $0xe0] sm:$0xff]
    %v113 = vld [vmem:[#allocation3 + $0xe8] sm:$0xff]
    %v114 = vld [vmem:[#allocation3 + $0xf0] sm:$0xff]
    %v115 = vld [vmem:[#allocation3 + $0xf8] sm:$0xff]
    %v116 = vunpack.c.l.bf16 %v84
    %v117 = vunpack.c.h.bf16 %v84
    %v118 = vunpack.c.l.bf16 %v85
    %v119 = vunpack.c.h.bf16 %v85
    %v120 = vunpack.c.l.bf16 %v86
    %v121 = vunpack.c.h.bf16 %v86
    %v122 = vunpack.c.l.bf16 %v87
    %v123 = vunpack.c.h.bf16 %v87
    %v124 = vunpack.c.l.bf16 %v88
    %v125 = vunpack.c.h.bf16 %v88
    %v126 = vunpack.c.l.bf16 %v89
    %v127 = vunpack.c.h.bf16 %v89
    %v128 = vunpack.c.l.bf16 %v90
    %v129 = vunpack.c.h.bf16 %v90
    %v130 = vunpack.c.l.bf16 %v91
    %v131 = vunpack.c.h.bf16 %v91
    %v132 = vunpack.c.l.bf16 %v92
    %v133 = vunpack.c.h.bf16 %v92
    %v134 = vunpack.c.l.bf16 %v93
    %v135 = vunpack.c.h.bf16 %v93
    %v136 = vunpack.c.l.bf16 %v94
    %v137 = vunpack.c.h.bf16 %v94
    %v138 = vunpack.c.l.bf16 %v95
    %v139 = vunpack.c.h.bf16 %v95
    %v140 = vunpack.c.l.bf16 %v96
    %v141 = vunpack.c.h.bf16 %v96
    %v142 = vunpack.c.l.bf16 %v97
    %v143 = vunpack.c.h.bf16 %v97
    %v144 = vunpack.c.l.bf16 %v98
    %v145 = vunpack.c.h.bf16 %v98
    %v146 = vunpack.c.l.bf16 %v99
    %v147 = vunpack.c.h.bf16 %v99
    %v148 = vunpack.c.l.bf16 %v100
    %v149 = vunpack.c.h.bf16 %v100
    %v150 = vunpack.c.l.bf16 %v101
    %v151 = vunpack.c.h.bf16 %v101
    %v152 = vunpack.c.l.bf16 %v102
    %v153 = vunpack.c.h.bf16 %v102
    %v154 = vunpack.c.l.bf16 %v103
    %v155 = vunpack.c.h.bf16 %v103
    %v156 = vunpack.c.l.bf16 %v104
    %v157 = vunpack.c.h.bf16 %v104
    %v158 = vunpack.c.l.bf16 %v105
    %v159 = vunpack.c.h.bf16 %v105
    %v160 = vunpack.c.l.bf16 %v106
    %v161 = vunpack.c.h.bf16 %v106
    %v162 = vunpack.c.l.bf16 %v107
    %v163 = vunpack.c.h.bf16 %v107
    %v164 = vunpack.c.l.bf16 %v108
    %v165 = vunpack.c.h.bf16 %v108
    %v166 = vunpack.c.l.bf16 %v109
    %v167 = vunpack.c.h.bf16 %v109
    %v168 = vunpack.c.l.bf16 %v110
    %v169 = vunpack.c.h.bf16 %v110
    %v170 = vunpack.c.l.bf16 %v111
    %v171 = vunpack.c.h.bf16 %v111
    %v172 = vunpack.c.l.bf16 %v112
    %v173 = vunpack.c.h.bf16 %v112
    %v174 = vunpack.c.l.bf16 %v113
    %v175 = vunpack.c.h.bf16 %v113
    %v176 = vunpack.c.l.bf16 %v114
    %v177 = vunpack.c.h.bf16 %v114
    %v178 = vunpack.c.l.bf16 %v115
    %v179 = vunpack.c.h.bf16 %v115
    %v180 = vld [vmem:[%s0] sm:$0xff]
    %182 = vset.pattern.permute.xlu0 0
    %183 = vperm.xlu0 %182, %v180
    %v184 = vpop.permute.xlu0 %183
    %v187 = vperm.slane %v83, 0
    %v188 = vperm.slane %v83, 2
    %v189 = vperm.slane %v83, 4
    %v190 = vperm.slane %v83, 6
    %v195 = vperm.slane %v187, 0
    %v196 = vperm.slane %v188, 0
    %v197 = vperm.slane %v189, 0
    %v198 = vperm.slane %v190, 0
    %v199 = vmul.f32 %v184, %v195
    %v200 = vmul.f32 %v184, %v196
    %v201 = vmul.f32 %v184, %v197
    %v202 = vmul.f32 %v184, %v198
    %v203 = vld [vmem:[%s3] sm:$0xf]
    %v205 = vperm.slane %v203, 0
    %v206 = vperm.slane %v203, 1
    %v207 = vperm.slane %v203, 2
    %v208 = vperm.slane %v203, 3
    %v213 = vadd.f32 %v199, %v205
    %v214 = vadd.f32 %v200, %v206
    %v215 = vadd.f32 %v201, %v207
    %v216 = vadd.f32 %v202, %v208
    %217 = vmatpush.msra.mxu0 %v176
    %218 = vmatpush.msra.mxu0 %v172
    %219 = vmatpush.msra.mxu0 %v168
    %220 = vmatpush.msra.mxu0 %v164
    %221 = vmatpush.msra.mxu0 %v160
    %222 = vmatpush.msra.mxu0 %v156
    %223 = vmatpush.msra.mxu0 %v152
    %224 = vmatpush.msra.mxu0 %v148
    %225 = vmatpush.msra.mxu0 %v144
    %226 = vmatpush.msra.mxu0 %v140
    %227 = vmatpush.msra.mxu0 %v136
    %228 = vmatpush.msra.mxu0 %v132
    %229 = vmatpush.msra.mxu0 %v128
    %230 = vmatpush.msra.mxu0 %v124
    %231 = vmatpush.msra.mxu0 %v120
    %232 = vmatpush.msra.mxu0 %v116
    %233 = vmatmul.f32.gmra.mxu0 0.0
    %v234 = vpop.f32.mrf.mxu0
    %v235 = vadd.f32 0.0, %v234
    %236 = vdwg.mxu0
    %237 = vmatpush.msra.mxu0 %v177
    %238 = vmatpush.msra.mxu0 %v173
    %239 = vmatpush.msra.mxu0 %v169
    %240 = vmatpush.msra.mxu0 %v165
    %241 = vmatpush.msra.mxu0 %v161
    %242 = vmatpush.msra.mxu0 %v157
    %243 = vmatpush.msra.mxu0 %v153
    %244 = vmatpush.msra.mxu0 %v149
    %245 = vmatpush.msra.mxu0 %v145
    %246 = vmatpush.msra.mxu0 %v141
    %247 = vmatpush.msra.mxu0 %v137
    %248 = vmatpush.msra.mxu0 %v133
    %249 = vmatpush.msra.mxu0 %v129
    %250 = vmatpush.msra.mxu0 %v125
    %251 = vmatpush.msra.mxu0 %v121
    %252 = vmatpush.msra.mxu0 %v117
    %253 = vmatmul.f32.gmra.mxu0 0.0
    %v254 = vpop.f32.mrf.mxu0
    %v255 = vadd.f32 0.0, %v254
    %256 = vdwg.mxu0
    %257 = vmatpush.msra.mxu0 %v178
    %258 = vmatpush.msra.mxu0 %v174
    %259 = vmatpush.msra.mxu0 %v170
    %260 = vmatpush.msra.mxu0 %v166
    %261 = vmatpush.msra.mxu0 %v162
    %262 = vmatpush.msra.mxu0 %v158
    %263 = vmatpush.msra.mxu0 %v154
    %264 = vmatpush.msra.mxu0 %v150
    %265 = vmatpush.msra.mxu0 %v146
    %266 = vmatpush.msra.mxu0 %v142
    %267 = vmatpush.msra.mxu0 %v138
    %268 = vmatpush.msra.mxu0 %v134
    %269 = vmatpush.msra.mxu0 %v130
    %270 = vmatpush.msra.mxu0 %v126
    %271 = vmatpush.msra.mxu0 %v122
    %272 = vmatpush.msra.mxu0 %v118
    %273 = vmatmul.f32.gmra.mxu0 0.0
    %v274 = vpop.f32.mrf.mxu0
    %v275 = vadd.f32 0.0, %v274
    %276 = vdwg.mxu0
    %277 = vmatpush.msra.mxu0 %v179
    %278 = vmatpush.msra.mxu0 %v175
    %279 = vmatpush.msra.mxu0 %v171
    %280 = vmatpush.msra.mxu0 %v167
    %281 = vmatpush.msra.mxu0 %v163
    %282 = vmatpush.msra.mxu0 %v159
    %283 = vmatpush.msra.mxu0 %v155
    %284 = vmatpush.msra.mxu0 %v151
    %285 = vmatpush.msra.mxu0 %v147
    %286 = vmatpush.msra.mxu0 %v143
    %287 = vmatpush.msra.mxu0 %v139
    %288 = vmatpush.msra.mxu0 %v135
    %289 = vmatpush.msra.mxu0 %v131
    %290 = vmatpush.msra.mxu0 %v127
    %291 = vmatpush.msra.mxu0 %v123
    %292 = vmatpush.msra.mxu0 %v119
    %293 = vmatmul.f32.gmra.mxu0 0.0
    %v294 = vpop.f32.mrf.mxu0
    %v295 = vadd.f32 0.0, %v294
    %296 = vdwg.mxu0
    %v297 = vadd.f32 %v213, %v235
    %v298 = vadd.f32 %v214, %v255
    %v299 = vadd.f32 %v215, %v275
    %v300 = vadd.f32 %v216, %v295
    %v301 = vtanh.pop %v297
    %v302 = vmul.f32 %v301, 0.5
    %v303 = vadd.f32 %v302, 0.5
    %v304 = vtanh.pop %v298
    %v305 = vmul.f32 %v304, 0.5
    %v306 = vadd.f32 %v305, 0.5
    %v307 = vtanh.pop %v299
    %v308 = vtanh.pop %v300
    %v309 = vmul.f32 %v308, 0.5
    %v310 = vadd.f32 %v309, 0.5
    %v311 = vmul.f32 %v306, 0.0
    %v312 = vmul.f32 %v303, %v307
    %v313 = vadd.f32 %v311, %v312
    %v314 = vtanh.pop %v313
    %v315 = vmul.f32 %v310, %v314
    %316 = vmatpush.msra.mxu0 %v176
    %317 = vmatpush.msra.mxu0 %v172
    %318 = vmatpush.msra.mxu0 %v168
    %319 = vmatpush.msra.mxu0 %v164
    %320 = vmatpush.msra.mxu0 %v160
    %321 = vmatpush.msra.mxu0 %v156
    %322 = vmatpush.msra.mxu0 %v152
    %323 = vmatpush.msra.mxu0 %v148
    %324 = vmatpush.msra.mxu0 %v144
    %325 = vmatpush.msra.mxu0 %v140
    %326 = vmatpush.msra.mxu0 %v136
    %327 = vmatpush.msra.mxu0 %v132
    %328 = vmatpush.msra.mxu0 %v128
    %329 = vmatpush.msra.mxu0 %v124
    %330 = vmatpush.msra.mxu0 %v120
    %331 = vmatpush.msra.mxu0 %v116
    %332 = vmatmul.f32.gmra.mxu0 %v315
    %v333 = vpop.f32.mrf.mxu0
    %v334 = vadd.f32 0.0, %v333
    %335 = vdwg.mxu0
    %336 = vmatpush.msra.mxu0 %v177
    %337 = vmatpush.msra.mxu0 %v173
    %338 = vmatpush.msra.mxu0 %v169
    %339 = vmatpush.msra.mxu0 %v165
    %340 = vmatpush.msra.mxu0 %v161
    %341 = vmatpush.msra.mxu0 %v157
    %342 = vmatpush.msra.mxu0 %v153
    %343 = vmatpush.msra.mxu0 %v149
    %344 = vmatpush.msra.mxu0 %v145
    %345 = vmatpush.msra.mxu0 %v141
    %346 = vmatpush.msra.mxu0 %v137
    %347 = vmatpush.msra.mxu0 %v133
    %348 = vmatpush.msra.mxu0 %v129
    %349 = vmatpush.msra.mxu0 %v125
    %350 = vmatpush.msra.mxu0 %v121
    %351 = vmatpush.msra.mxu0 %v117
    %352 = vmatmul.f32.gmra.mxu0 %v315
    %v353 = vpop.f32.mrf.mxu0
    %v354 = vadd.f32 0.0, %v353
    %355 = vdwg.mxu0
    %356 = vmatpush.msra.mxu0 %v178
    %357 = vmatpush.msra.mxu0 %v174
    %358 = vmatpush.msra.mxu0 %v170
    %359 = vmatpush.msra.mxu0 %v166
    %360 = vmatpush.msra.mxu0 %v162
    %361 = vmatpush.msra.mxu0 %v158
    %362 = vmatpush.msra.mxu0 %v154
    %363 = vmatpush.msra.mxu0 %v150
    %364 = vmatpush.msra.mxu0 %v146
    %365 = vmatpush.msra.mxu0 %v142
    %366 = vmatpush.msra.mxu0 %v138
    %367 = vmatpush.msra.mxu0 %v134
    %368 = vmatpush.msra.mxu0 %v130
    %369 = vmatpush.msra.mxu0 %v126
    %370 = vmatpush.msra.mxu0 %v122
    %371 = vmatpush.msra.mxu0 %v118
    %372 = vmatmul.f32.gmra.mxu0 %v315
    %v373 = vpop.f32.mrf.mxu0
    %v374 = vadd.f32 0.0, %v373
    %375 = vdwg.mxu0
    %376 = vmatpush.msra.mxu0 %v179
    %377 = vmatpush.msra.mxu0 %v175
    %378 = vmatpush.msra.mxu0 %v171
    %379 = vmatpush.msra.mxu0 %v167
    %380 = vmatpush.msra.mxu0 %v163
    %381 = vmatpush.msra.mxu0 %v159
    %382 = vmatpush.msra.mxu0 %v155
    %383 = vmatpush.msra.mxu0 %v151
    %384 = vmatpush.msra.mxu0 %v147
    %385 = vmatpush.msra.mxu0 %v143
    %386 = vmatpush.msra.mxu0 %v139
    %387 = vmatpush.msra.mxu0 %v135
    %388 = vmatpush.msra.mxu0 %v131
    %389 = vmatpush.msra.mxu0 %v127
    %390 = vmatpush.msra.mxu0 %v123
    %391 = vmatpush.msra.mxu0 %v119
    %392 = vmatmul.f32.gmra.mxu0 %v315
    %v393 = vpop.f32.mrf.mxu0
    %v394 = vadd.f32 0.0, %v393
    %395 = vdwg.mxu0
    %v400 = vrot.slane %v334, 7
    %v401 = vrot.slane %v354, 7
    %v402 = vrot.slane %v374, 7
    %v403 = vrot.slane %v394, 7
    %v408 = vadd.f32 %v213, %v400
    %v409 = vadd.f32 %v214, %v401
    %v410 = vadd.f32 %v215, %v402
    %v411 = vadd.f32 %v216, %v403
    %v412 = vtanh.pop %v408
    %v413 = vmul.f32 %v412, 0.5
    %v414 = vadd.f32 %v413, 0.5
    %v415 = vtanh.pop %v409
    %v416 = vmul.f32 %v415, 0.5
    %v417 = vadd.f32 %v416, 0.5
    %v418 = vtanh.pop %v410
    %v419 = vtanh.pop %v411
    %v420 = vmul.f32 %v419, 0.5
    %v421 = vadd.f32 %v420, 0.5
    %v423 = vrot.slane %v313, 7
    %v425 = vmul.f32 %v417, %v423
    %v426 = vmul.f32 %v414, %v418
    %v427 = vadd.f32 %v425, %v426
    %v428 = vtanh.pop %v427
    %v429 = vmul.f32 %v421, %v428
    %v431 = vrot.slane %v429, 1
    %433 = vmatpush.msra.mxu0 %v176
    %434 = vmatpush.msra.mxu0 %v172
    %435 = vmatpush.msra.mxu0 %v168
    %436 = vmatpush.msra.mxu0 %v164
    %437 = vmatpush.msra.mxu0 %v160
    %438 = vmatpush.msra.mxu0 %v156
    %439 = vmatpush.msra.mxu0 %v152
    %440 = vmatpush.msra.mxu0 %v148
    %441 = vmatpush.msra.mxu0 %v144
    %442 = vmatpush.msra.mxu0 %v140
    %443 = vmatpush.msra.mxu0 %v136
    %444 = vmatpush.msra.mxu0 %v132
    %445 = vmatpush.msra.mxu0 %v128
    %446 = vmatpush.msra.mxu0 %v124
    %447 = vmatpush.msra.mxu0 %v120
    %448 = vmatpush.msra.mxu0 %v116
    %449 = vmatmul.f32.gmra.mxu0 %v431
    %v450 = vpop.f32.mrf.mxu0
    %v451 = vadd.f32 0.0, %v450
    %452 = vdwg.mxu0
    %453 = vmatpush.msra.mxu0 %v177
    %454 = vmatpush.msra.mxu0 %v173
    %455 = vmatpush.msra.mxu0 %v169
    %456 = vmatpush.msra.mxu0 %v165
    %457 = vmatpush.msra.mxu0 %v161
    %458 = vmatpush.msra.mxu0 %v157
    %459 = vmatpush.msra.mxu0 %v153
    %460 = vmatpush.msra.mxu0 %v149
    %461 = vmatpush.msra.mxu0 %v145
    %462 = vmatpush.msra.mxu0 %v141
    %463 = vmatpush.msra.mxu0 %v137
    %464 = vmatpush.msra.mxu0 %v133
    %465 = vmatpush.msra.mxu0 %v129
    %466 = vmatpush.msra.mxu0 %v125
    %467 = vmatpush.msra.mxu0 %v121
    %468 = vmatpush.msra.mxu0 %v117
    %469 = vmatmul.f32.gmra.mxu0 %v431
    %v470 = vpop.f32.mrf.mxu0
    %v471 = vadd.f32 0.0, %v470
    %472 = vdwg.mxu0
    %473 = vmatpush.msra.mxu0 %v178
    %474 = vmatpush.msra.mxu0 %v174
    %475 = vmatpush.msra.mxu0 %v170
    %476 = vmatpush.msra.mxu0 %v166
    %477 = vmatpush.msra.mxu0 %v162
    %478 = vmatpush.msra.mxu0 %v158
    %479 = vmatpush.msra.mxu0 %v154
    %480 = vmatpush.msra.mxu0 %v150
    %481 = vmatpush.msra.mxu0 %v146
    %482 = vmatpush.msra.mxu0 %v142
    %483 = vmatpush.msra.mxu0 %v138
    %484 = vmatpush.msra.mxu0 %v134
    %485 = vmatpush.msra.mxu0 %v130
    %486 = vmatpush.msra.mxu0 %v126
    %487 = vmatpush.msra.mxu0 %v122
    %488 = vmatpush.msra.mxu0 %v118
    %489 = vmatmul.f32.gmra.mxu0 %v431
    %v490 = vpop.f32.mrf.mxu0
    %v491 = vadd.f32 0.0, %v490
    %492 = vdwg.mxu0
    %493 = vmatpush.msra.mxu0 %v179
    %494 = vmatpush.msra.mxu0 %v175
    %495 = vmatpush.msra.mxu0 %v171
    %496 = vmatpush.msra.mxu0 %v167
    %497 = vmatpush.msra.mxu0 %v163
    %498 = vmatpush.msra.mxu0 %v159
    %499 = vmatpush.msra.mxu0 %v155
    %500 = vmatpush.msra.mxu0 %v151
    %501 = vmatpush.msra.mxu0 %v147
    %502 = vmatpush.msra.mxu0 %v143
    %503 = vmatpush.msra.mxu0 %v139
    %504 = vmatpush.msra.mxu0 %v135
    %505 = vmatpush.msra.mxu0 %v131
    %506 = vmatpush.msra.mxu0 %v127
    %507 = vmatpush.msra.mxu0 %v123
    %508 = vmatpush.msra.mxu0 %v119
    %509 = vmatmul.f32.gmra.mxu0 %v431
    %v510 = vpop.f32.mrf.mxu0
    %v511 = vadd.f32 0.0, %v510
    %512 = vdwg.mxu0
    %v517 = vrot.slane %v451, 6
    %v518 = vrot.slane %v471, 6
    %v519 = vrot.slane %v491, 6
    %v520 = vrot.slane %v511, 6
    %v525 = vadd.f32 %v213, %v517
    %v526 = vadd.f32 %v214, %v518
    %v527 = vadd.f32 %v215, %v519
    %v528 = vadd.f32 %v216, %v520
    %v529 = vtanh.pop %v525
    %v530 = vmul.f32 %v529, 0.5
    %v531 = vadd.f32 %v530, 0.5
    %v532 = vtanh.pop %v526
    %v533 = vmul.f32 %v532, 0.5
    %v534 = vadd.f32 %v533, 0.5
    %v535 = vtanh.pop %v527
    %v536 = vtanh.pop %v528
    %v537 = vmul.f32 %v536, 0.5
    %v538 = vadd.f32 %v537, 0.5
    %v540 = vrot.slane %v427, 7
    %v542 = vmul.f32 %v534, %v540
    %v543 = vmul.f32 %v531, %v535
    %v544 = vadd.f32 %v542, %v543
    %v545 = vtanh.pop %v544
    %v546 = vmul.f32 %v538, %v545
    %v548 = vrot.slane %v546, 2
    %550 = vmatpush.msra.mxu0 %v176
    %551 = vmatpush.msra.mxu0 %v172
    %552 = vmatpush.msra.mxu0 %v168
    %553 = vmatpush.msra.mxu0 %v164
    %554 = vmatpush.msra.mxu0 %v160
    %555 = vmatpush.msra.mxu0 %v156
    %556 = vmatpush.msra.mxu0 %v152
    %557 = vmatpush.msra.mxu0 %v148
    %558 = vmatpush.msra.mxu0 %v144
    %559 = vmatpush.msra.mxu0 %v140
    %560 = vmatpush.msra.mxu0 %v136
    %561 = vmatpush.msra.mxu0 %v132
    %562 = vmatpush.msra.mxu0 %v128
    %563 = vmatpush.msra.mxu0 %v124
    %564 = vmatpush.msra.mxu0 %v120
    %565 = vmatpush.msra.mxu0 %v116
    %566 = vmatmul.f32.gmra.mxu0 %v548
    %v567 = vpop.f32.mrf.mxu0
    %v568 = vadd.f32 0.0, %v567
    %569 = vdwg.mxu0
    %570 = vmatpush.msra.mxu0 %v177
    %571 = vmatpush.msra.mxu0 %v173
    %572 = vmatpush.msra.mxu0 %v169
    %573 = vmatpush.msra.mxu0 %v165
    %574 = vmatpush.msra.mxu0 %v161
    %575 = vmatpush.msra.mxu0 %v157
    %576 = vmatpush.msra.mxu0 %v153
    %577 = vmatpush.msra.mxu0 %v149
    %578 = vmatpush.msra.mxu0 %v145
    %579 = vmatpush.msra.mxu0 %v141
    %580 = vmatpush.msra.mxu0 %v137
    %581 = vmatpush.msra.mxu0 %v133
    %582 = vmatpush.msra.mxu0 %v129
    %583 = vmatpush.msra.mxu0 %v125
    %584 = vmatpush.msra.mxu0 %v121
    %585 = vmatpush.msra.mxu0 %v117
    %586 = vmatmul.f32.gmra.mxu0 %v548
    %v587 = vpop.f32.mrf.mxu0
    %v588 = vadd.f32 0.0, %v587
    %589 = vdwg.mxu0
    %590 = vmatpush.msra.mxu0 %v178
    %591 = vmatpush.msra.mxu0 %v174
    %592 = vmatpush.msra.mxu0 %v170
    %593 = vmatpush.msra.mxu0 %v166
    %594 = vmatpush.msra.mxu0 %v162
    %595 = vmatpush.msra.mxu0 %v158
    %596 = vmatpush.msra.mxu0 %v154
    %597 = vmatpush.msra.mxu0 %v150
    %598 = vmatpush.msra.mxu0 %v146
    %599 = vmatpush.msra.mxu0 %v142
    %600 = vmatpush.msra.mxu0 %v138
    %601 = vmatpush.msra.mxu0 %v134
    %602 = vmatpush.msra.mxu0 %v130
    %603 = vmatpush.msra.mxu0 %v126
    %604 = vmatpush.msra.mxu0 %v122
    %605 = vmatpush.msra.mxu0 %v118
    %606 = vmatmul.f32.gmra.mxu0 %v548
    %v607 = vpop.f32.mrf.mxu0
    %v608 = vadd.f32 0.0, %v607
    %609 = vdwg.mxu0
    %610 = vmatpush.msra.mxu0 %v179
    %611 = vmatpush.msra.mxu0 %v175
    %612 = vmatpush.msra.mxu0 %v171
    %613 = vmatpush.msra.mxu0 %v167
    %614 = vmatpush.msra.mxu0 %v163
    %615 = vmatpush.msra.mxu0 %v159
    %616 = vmatpush.msra.mxu0 %v155
    %617 = vmatpush.msra.mxu0 %v151
    %618 = vmatpush.msra.mxu0 %v147
    %619 = vmatpush.msra.mxu0 %v143
    %620 = vmatpush.msra.mxu0 %v139
    %621 = vmatpush.msra.mxu0 %v135
    %622 = vmatpush.msra.mxu0 %v131
    %623 = vmatpush.msra.mxu0 %v127
    %624 = vmatpush.msra.mxu0 %v123
    %625 = vmatpush.msra.mxu0 %v119
    %626 = vmatmul.f32.gmra.mxu0 %v548
    %v627 = vpop.f32.mrf.mxu0
    %v628 = vadd.f32 0.0, %v627
    %629 = vdwg.mxu0
    %v634 = vrot.slane %v568, 5
    %v635 = vrot.slane %v588, 5
    %v636 = vrot.slane %v608, 5
    %v637 = vrot.slane %v628, 5
    %v642 = vadd.f32 %v213, %v634
    %v643 = vadd.f32 %v214, %v635
    %v644 = vadd.f32 %v215, %v636
    %v645 = vadd.f32 %v216, %v637
    %v646 = vtanh.pop %v642
    %v647 = vmul.f32 %v646, 0.5
    %v648 = vadd.f32 %v647, 0.5
    %v649 = vtanh.pop %v643
    %v650 = vmul.f32 %v649, 0.5
    %v651 = vadd.f32 %v650, 0.5
    %v652 = vtanh.pop %v644
    %v653 = vtanh.pop %v645
    %v654 = vmul.f32 %v653, 0.5
    %v655 = vadd.f32 %v654, 0.5
    %v657 = vrot.slane %v544, 7
    %v659 = vmul.f32 %v651, %v657
    %v660 = vmul.f32 %v648, %v652
    %v661 = vadd.f32 %v659, %v660
    %v662 = vtanh.pop %v661
    %v663 = vmul.f32 %v655, %v662
    %v665 = vrot.slane %v663, 3
    %667 = vmatpush.msra.mxu0 %v176
    %668 = vmatpush.msra.mxu0 %v172
    %669 = vmatpush.msra.mxu0 %v168
    %670 = vmatpush.msra.mxu0 %v164
    %671 = vmatpush.msra.mxu0 %v160
    %672 = vmatpush.msra.mxu0 %v156
    %673 = vmatpush.msra.mxu0 %v152
    %674 = vmatpush.msra.mxu0 %v148
    %675 = vmatpush.msra.mxu0 %v144
    %676 = vmatpush.msra.mxu0 %v140
    %677 = vmatpush.msra.mxu0 %v136
    %678 = vmatpush.msra.mxu0 %v132
    %679 = vmatpush.msra.mxu0 %v128
    %680 = vmatpush.msra.mxu0 %v124
    %681 = vmatpush.msra.mxu0 %v120
    %682 = vmatpush.msra.mxu0 %v116
    %683 = vmatmul.f32.gmra.mxu0 %v665
    %v684 = vpop.f32.mrf.mxu0
    %v685 = vadd.f32 0.0, %v684
    %686 = vdwg.mxu0
    %687 = vmatpush.msra.mxu0 %v177
    %688 = vmatpush.msra.mxu0 %v173
    %689 = vmatpush.msra.mxu0 %v169
    %690 = vmatpush.msra.mxu0 %v165
    %691 = vmatpush.msra.mxu0 %v161
    %692 = vmatpush.msra.mxu0 %v157
    %693 = vmatpush.msra.mxu0 %v153
    %694 = vmatpush.msra.mxu0 %v149
    %695 = vmatpush.msra.mxu0 %v145
    %696 = vmatpush.msra.mxu0 %v141
    %697 = vmatpush.msra.mxu0 %v137
    %698 = vmatpush.msra.mxu0 %v133
    %699 = vmatpush.msra.mxu0 %v129
    %700 = vmatpush.msra.mxu0 %v125
    %701 = vmatpush.msra.mxu0 %v121
    %702 = vmatpush.msra.mxu0 %v117
    %703 = vmatmul.f32.gmra.mxu0 %v665
    %v704 = vpop.f32.mrf.mxu0
    %v705 = vadd.f32 0.0, %v704
    %706 = vdwg.mxu0
    %707 = vmatpush.msra.mxu0 %v178
    %708 = vmatpush.msra.mxu0 %v174
    %709 = vmatpush.msra.mxu0 %v170
    %710 = vmatpush.msra.mxu0 %v166
    %711 = vmatpush.msra.mxu0 %v162
    %712 = vmatpush.msra.mxu0 %v158
    %713 = vmatpush.msra.mxu0 %v154
    %714 = vmatpush.msra.mxu0 %v150
    %715 = vmatpush.msra.mxu0 %v146
    %716 = vmatpush.msra.mxu0 %v142
    %717 = vmatpush.msra.mxu0 %v138
    %718 = vmatpush.msra.mxu0 %v134
    %719 = vmatpush.msra.mxu0 %v130
    %720 = vmatpush.msra.mxu0 %v126
    %721 = vmatpush.msra.mxu0 %v122
    %722 = vmatpush.msra.mxu0 %v118
    %723 = vmatmul.f32.gmra.mxu0 %v665
    %v724 = vpop.f32.mrf.mxu0
    %v725 = vadd.f32 0.0, %v724
    %726 = vdwg.mxu0
    %727 = vmatpush.msra.mxu0 %v179
    %728 = vmatpush.msra.mxu0 %v175
    %729 = vmatpush.msra.mxu0 %v171
    %730 = vmatpush.msra.mxu0 %v167
    %731 = vmatpush.msra.mxu0 %v163
    %732 = vmatpush.msra.mxu0 %v159
    %733 = vmatpush.msra.mxu0 %v155
    %734 = vmatpush.msra.mxu0 %v151
    %735 = vmatpush.msra.mxu0 %v147
    %736 = vmatpush.msra.mxu0 %v143
    %737 = vmatpush.msra.mxu0 %v139
    %738 = vmatpush.msra.mxu0 %v135
    %739 = vmatpush.msra.mxu0 %v131
    %740 = vmatpush.msra.mxu0 %v127
    %741 = vmatpush.msra.mxu0 %v123
    %742 = vmatpush.msra.mxu0 %v119
    %743 = vmatmul.f32.gmra.mxu0 %v665
    %v744 = vpop.f32.mrf.mxu0
    %v745 = vadd.f32 0.0, %v744
    %746 = vdwg.mxu0
    %v751 = vrot.slane %v685, 4
    %v752 = vrot.slane %v705, 4
    %v753 = vrot.slane %v725, 4
    %v754 = vrot.slane %v745, 4
    %v759 = vadd.f32 %v213, %v751
    %v760 = vadd.f32 %v214, %v752
    %v761 = vadd.f32 %v215, %v753
    %v762 = vadd.f32 %v216, %v754
    %v763 = vtanh.pop %v759
    %v764 = vmul.f32 %v763, 0.5
    %v765 = vadd.f32 %v764, 0.5
    %v766 = vtanh.pop %v760
    %v767 = vmul.f32 %v766, 0.5
    %v768 = vadd.f32 %v767, 0.5
    %v769 = vtanh.pop %v761
    %v770 = vtanh.pop %v762
    %v771 = vmul.f32 %v770, 0.5
    %v772 = vadd.f32 %v771, 0.5
    %v774 = vrot.slane %v661, 7
    %v776 = vmul.f32 %v768, %v774
    %v777 = vmul.f32 %v765, %v769
    %v778 = vadd.f32 %v776, %v777
    %v779 = vtanh.pop %v778
    %v780 = vmul.f32 %v772, %v779
    %v782 = vrot.slane %v780, 4
    %784 = vmatpush.msra.mxu0 %v176
    %785 = vmatpush.msra.mxu0 %v172
    %786 = vmatpush.msra.mxu0 %v168
    %787 = vmatpush.msra.mxu0 %v164
    %788 = vmatpush.msra.mxu0 %v160
    %789 = vmatpush.msra.mxu0 %v156
    %790 = vmatpush.msra.mxu0 %v152
    %791 = vmatpush.msra.mxu0 %v148
    %792 = vmatpush.msra.mxu0 %v144
    %793 = vmatpush.msra.mxu0 %v140
    %794 = vmatpush.msra.mxu0 %v136
    %795 = vmatpush.msra.mxu0 %v132
    %796 = vmatpush.msra.mxu0 %v128
    %797 = vmatpush.msra.mxu0 %v124
    %798 = vmatpush.msra.mxu0 %v120
    %799 = vmatpush.msra.mxu0 %v116
    %800 = vmatmul.f32.gmra.mxu0 %v782
    %v801 = vpop.f32.mrf.mxu0
    %v802 = vadd.f32 0.0, %v801
    %803 = vdwg.mxu0
    %804 = vmatpush.msra.mxu0 %v177
    %805 = vmatpush.msra.mxu0 %v173
    %806 = vmatpush.msra.mxu0 %v169
    %807 = vmatpush.msra.mxu0 %v165
    %808 = vmatpush.msra.mxu0 %v161
    %809 = vmatpush.msra.mxu0 %v157
    %810 = vmatpush.msra.mxu0 %v153
    %811 = vmatpush.msra.mxu0 %v149
    %812 = vmatpush.msra.mxu0 %v145
    %813 = vmatpush.msra.mxu0 %v141
    %814 = vmatpush.msra.mxu0 %v137
    %815 = vmatpush.msra.mxu0 %v133
    %816 = vmatpush.msra.mxu0 %v129
    %817 = vmatpush.msra.mxu0 %v125
    %818 = vmatpush.msra.mxu0 %v121
    %819 = vmatpush.msra.mxu0 %v117
    %820 = vmatmul.f32.gmra.mxu0 %v782
    %v821 = vpop.f32.mrf.mxu0
    %v822 = vadd.f32 0.0, %v821
    %823 = vdwg.mxu0
    %824 = vmatpush.msra.mxu0 %v178
    %825 = vmatpush.msra.mxu0 %v174
    %826 = vmatpush.msra.mxu0 %v170
    %827 = vmatpush.msra.mxu0 %v166
    %828 = vmatpush.msra.mxu0 %v162
    %829 = vmatpush.msra.mxu0 %v158
    %830 = vmatpush.msra.mxu0 %v154
    %831 = vmatpush.msra.mxu0 %v150
    %832 = vmatpush.msra.mxu0 %v146
    %833 = vmatpush.msra.mxu0 %v142
    %834 = vmatpush.msra.mxu0 %v138
    %835 = vmatpush.msra.mxu0 %v134
    %836 = vmatpush.msra.mxu0 %v130
    %837 = vmatpush.msra.mxu0 %v126
    %838 = vmatpush.msra.mxu0 %v122
    %839 = vmatpush.msra.mxu0 %v118
    %840 = vmatmul.f32.gmra.mxu0 %v782
    %v841 = vpop.f32.mrf.mxu0
    %v842 = vadd.f32 0.0, %v841
    %843 = vdwg.mxu0
    %844 = vmatpush.msra.mxu0 %v179
    %845 = vmatpush.msra.mxu0 %v175
    %846 = vmatpush.msra.mxu0 %v171
    %847 = vmatpush.msra.mxu0 %v167
    %848 = vmatpush.msra.mxu0 %v163
    %849 = vmatpush.msra.mxu0 %v159
    %850 = vmatpush.msra.mxu0 %v155
    %851 = vmatpush.msra.mxu0 %v151
    %852 = vmatpush.msra.mxu0 %v147
    %853 = vmatpush.msra.mxu0 %v143
    %854 = vmatpush.msra.mxu0 %v139
    %855 = vmatpush.msra.mxu0 %v135
    %856 = vmatpush.msra.mxu0 %v131
    %857 = vmatpush.msra.mxu0 %v127
    %858 = vmatpush.msra.mxu0 %v123
    %859 = vmatpush.msra.mxu0 %v119
    %860 = vmatmul.f32.gmra.mxu0 %v782
    %v861 = vpop.f32.mrf.mxu0
    %v862 = vadd.f32 0.0, %v861
    %863 = vdwg.mxu0
    %v868 = vrot.slane %v802, 3
    %v869 = vrot.slane %v822, 3
    %v870 = vrot.slane %v842, 3
    %v871 = vrot.slane %v862, 3
    %v876 = vadd.f32 %v213, %v868
    %v877 = vadd.f32 %v214, %v869
    %v878 = vadd.f32 %v215, %v870
    %v879 = vadd.f32 %v216, %v871
    %v880 = vtanh.pop %v876
    %v881 = vmul.f32 %v880, 0.5
    %v882 = vadd.f32 %v881, 0.5
    %v883 = vtanh.pop %v877
    %v884 = vmul.f32 %v883, 0.5
    %v885 = vadd.f32 %v884, 0.5
    %v886 = vtanh.pop %v878
    %v887 = vtanh.pop %v879
    %v888 = vmul.f32 %v887, 0.5
    %v889 = vadd.f32 %v888, 0.5
    %v891 = vrot.slane %v778, 7
    %v893 = vmul.f32 %v885, %v891
    %v894 = vmul.f32 %v882, %v886
    %v895 = vadd.f32 %v893, %v894
    %v896 = vtanh.pop %v895
    %v897 = vmul.f32 %v889, %v896
    %v899 = vrot.slane %v897, 5
    %901 = vmatpush.msra.mxu0 %v176
    %902 = vmatpush.msra.mxu0 %v172
    %903 = vmatpush.msra.mxu0 %v168
    %904 = vmatpush.msra.mxu0 %v164
    %905 = vmatpush.msra.mxu0 %v160
    %906 = vmatpush.msra.mxu0 %v156
    %907 = vmatpush.msra.mxu0 %v152
    %908 = vmatpush.msra.mxu0 %v148
    %909 = vmatpush.msra.mxu0 %v144
    %910 = vmatpush.msra.mxu0 %v140
    %911 = vmatpush.msra.mxu0 %v136
    %912 = vmatpush.msra.mxu0 %v132
    %913 = vmatpush.msra.mxu0 %v128
    %914 = vmatpush.msra.mxu0 %v124
    %915 = vmatpush.msra.mxu0 %v120
    %916 = vmatpush.msra.mxu0 %v116
    %917 = vmatmul.f32.gmra.mxu0 %v899
    %v918 = vpop.f32.mrf.mxu0
    %v919 = vadd.f32 0.0, %v918
    %920 = vdwg.mxu0
    %921 = vmatpush.msra.mxu0 %v177
    %922 = vmatpush.msra.mxu0 %v173
    %923 = vmatpush.msra.mxu0 %v169
    %924 = vmatpush.msra.mxu0 %v165
    %925 = vmatpush.msra.mxu0 %v161
    %926 = vmatpush.msra.mxu0 %v157
    %927 = vmatpush.msra.mxu0 %v153
    %928 = vmatpush.msra.mxu0 %v149
    %929 = vmatpush.msra.mxu0 %v145
    %930 = vmatpush.msra.mxu0 %v141
    %931 = vmatpush.msra.mxu0 %v137
    %932 = vmatpush.msra.mxu0 %v133
    %933 = vmatpush.msra.mxu0 %v129
    %934 = vmatpush.msra.mxu0 %v125
    %935 = vmatpush.msra.mxu0 %v121
    %936 = vmatpush.msra.mxu0 %v117
    %937 = vmatmul.f32.gmra.mxu0 %v899
    %v938 = vpop.f32.mrf.mxu0
    %v939 = vadd.f32 0.0, %v938
    %940 = vdwg.mxu0
    %941 = vmatpush.msra.mxu0 %v178
    %942 = vmatpush.msra.mxu0 %v174
    %943 = vmatpush.msra.mxu0 %v170
    %944 = vmatpush.msra.mxu0 %v166
    %945 = vmatpush.msra.mxu0 %v162
    %946 = vmatpush.msra.mxu0 %v158
    %947 = vmatpush.msra.mxu0 %v154
    %948 = vmatpush.msra.mxu0 %v150
    %949 = vmatpush.msra.mxu0 %v146
    %950 = vmatpush.msra.mxu0 %v142
    %951 = vmatpush.msra.mxu0 %v138
    %952 = vmatpush.msra.mxu0 %v134
    %953 = vmatpush.msra.mxu0 %v130
    %954 = vmatpush.msra.mxu0 %v126
    %955 = vmatpush.msra.mxu0 %v122
    %956 = vmatpush.msra.mxu0 %v118
    %957 = vmatmul.f32.gmra.mxu0 %v899
    %v958 = vpop.f32.mrf.mxu0
    %v959 = vadd.f32 0.0, %v958
    %960 = vdwg.mxu0
    %961 = vmatpush.msra.mxu0 %v179
    %962 = vmatpush.msra.mxu0 %v175
    %963 = vmatpush.msra.mxu0 %v171
    %964 = vmatpush.msra.mxu0 %v167
    %965 = vmatpush.msra.mxu0 %v163
    %966 = vmatpush.msra.mxu0 %v159
    %967 = vmatpush.msra.mxu0 %v155
    %968 = vmatpush.msra.mxu0 %v151
    %969 = vmatpush.msra.mxu0 %v147
    %970 = vmatpush.msra.mxu0 %v143
    %971 = vmatpush.msra.mxu0 %v139
    %972 = vmatpush.msra.mxu0 %v135
    %973 = vmatpush.msra.mxu0 %v131
    %974 = vmatpush.msra.mxu0 %v127
    %975 = vmatpush.msra.mxu0 %v123
    %976 = vmatpush.msra.mxu0 %v119
    %977 = vmatmul.f32.gmra.mxu0 %v899
    %v978 = vpop.f32.mrf.mxu0
    %v979 = vadd.f32 0.0, %v978
    %980 = vdwg.mxu0
    %v985 = vrot.slane %v919, 2
    %v986 = vrot.slane %v939, 2
    %v987 = vrot.slane %v959, 2
    %v988 = vrot.slane %v979, 2
    %v993 = vadd.f32 %v213, %v985
    %v994 = vadd.f32 %v214, %v986
    %v995 = vadd.f32 %v215, %v987
    %v996 = vadd.f32 %v216, %v988
    %v997 = vtanh.pop %v993
    %v998 = vmul.f32 %v997, 0.5
    %v999 = vadd.f32 %v998, 0.5
    %v1000 = vtanh.pop %v994
    %v1001 = vmul.f32 %v1000, 0.5
    %v1002 = vadd.f32 %v1001, 0.5
    %v1003 = vtanh.pop %v995
    %v1004 = vtanh.pop %v996
    %v1005 = vmul.f32 %v1004, 0.5
    %v1006 = vadd.f32 %v1005, 0.5
    %v1008 = vrot.slane %v895, 7
    %v1010 = vmul.f32 %v1002, %v1008
    %v1011 = vmul.f32 %v999, %v1003
    %v1012 = vadd.f32 %v1010, %v1011
    %v1013 = vtanh.pop %v1012
    %v1014 = vmul.f32 %v1006, %v1013
    %v1016 = vrot.slane %v1014, 6
    %1018 = vmatpush.msra.mxu0 %v176
    %1019 = vmatpush.msra.mxu0 %v172
    %1020 = vmatpush.msra.mxu0 %v168
    %1021 = vmatpush.msra.mxu0 %v164
    %1022 = vmatpush.msra.mxu0 %v160
    %1023 = vmatpush.msra.mxu0 %v156
    %1024 = vmatpush.msra.mxu0 %v152
    %1025 = vmatpush.msra.mxu0 %v148
    %1026 = vmatpush.msra.mxu0 %v144
    %1027 = vmatpush.msra.mxu0 %v140
    %1028 = vmatpush.msra.mxu0 %v136
    %1029 = vmatpush.msra.mxu0 %v132
    %1030 = vmatpush.msra.mxu0 %v128
    %1031 = vmatpush.msra.mxu0 %v124
    %1032 = vmatpush.msra.mxu0 %v120
    %1033 = vmatpush.msra.mxu0 %v116
    %1034 = vmatmul.f32.gmra.mxu0 %v1016
    %v1035 = vpop.f32.mrf.mxu0
    %v1036 = vadd.f32 0.0, %v1035
    %1037 = vdwg.mxu0
    %1038 = vmatpush.msra.mxu0 %v177
    %1039 = vmatpush.msra.mxu0 %v173
    %1040 = vmatpush.msra.mxu0 %v169
    %1041 = vmatpush.msra.mxu0 %v165
    %1042 = vmatpush.msra.mxu0 %v161
    %1043 = vmatpush.msra.mxu0 %v157
    %1044 = vmatpush.msra.mxu0 %v153
    %1045 = vmatpush.msra.mxu0 %v149
    %1046 = vmatpush.msra.mxu0 %v145
    %1047 = vmatpush.msra.mxu0 %v141
    %1048 = vmatpush.msra.mxu0 %v137
    %1049 = vmatpush.msra.mxu0 %v133
    %1050 = vmatpush.msra.mxu0 %v129
    %1051 = vmatpush.msra.mxu0 %v125
    %1052 = vmatpush.msra.mxu0 %v121
    %1053 = vmatpush.msra.mxu0 %v117
    %1054 = vmatmul.f32.gmra.mxu0 %v1016
    %v1055 = vpop.f32.mrf.mxu0
    %v1056 = vadd.f32 0.0, %v1055
    %1057 = vdwg.mxu0
    %1058 = vmatpush.msra.mxu0 %v178
    %1059 = vmatpush.msra.mxu0 %v174
    %1060 = vmatpush.msra.mxu0 %v170
    %1061 = vmatpush.msra.mxu0 %v166
    %1062 = vmatpush.msra.mxu0 %v162
    %1063 = vmatpush.msra.mxu0 %v158
    %1064 = vmatpush.msra.mxu0 %v154
    %1065 = vmatpush.msra.mxu0 %v150
    %1066 = vmatpush.msra.mxu0 %v146
    %1067 = vmatpush.msra.mxu0 %v142
    %1068 = vmatpush.msra.mxu0 %v138
    %1069 = vmatpush.msra.mxu0 %v134
    %1070 = vmatpush.msra.mxu0 %v130
    %1071 = vmatpush.msra.mxu0 %v126
    %1072 = vmatpush.msra.mxu0 %v122
    %1073 = vmatpush.msra.mxu0 %v118
    %1074 = vmatmul.f32.gmra.mxu0 %v1016
    %v1075 = vpop.f32.mrf.mxu0
    %v1076 = vadd.f32 0.0, %v1075
    %1077 = vdwg.mxu0
    %1078 = vmatpush.msra.mxu0 %v179
    %1079 = vmatpush.msra.mxu0 %v175
    %1080 = vmatpush.msra.mxu0 %v171
    %1081 = vmatpush.msra.mxu0 %v167
    %1082 = vmatpush.msra.mxu0 %v163
    %1083 = vmatpush.msra.mxu0 %v159
    %1084 = vmatpush.msra.mxu0 %v155
    %1085 = vmatpush.msra.mxu0 %v151
    %1086 = vmatpush.msra.mxu0 %v147
    %1087 = vmatpush.msra.mxu0 %v143
    %1088 = vmatpush.msra.mxu0 %v139
    %1089 = vmatpush.msra.mxu0 %v135
    %1090 = vmatpush.msra.mxu0 %v131
    %1091 = vmatpush.msra.mxu0 %v127
    %1092 = vmatpush.msra.mxu0 %v123
    %1093 = vmatpush.msra.mxu0 %v119
    %1094 = vmatmul.f32.gmra.mxu0 %v1016
    %v1095 = vpop.f32.mrf.mxu0
    %v1096 = vadd.f32 0.0, %v1095
    %1097 = vdwg.mxu0
    %v1102 = vrot.slane %v1036, 1
    %v1103 = vrot.slane %v1056, 1
    %v1104 = vrot.slane %v1076, 1
    %v1105 = vrot.slane %v1096, 1
    %v1110 = vadd.f32 %v213, %v1102
    %v1111 = vadd.f32 %v214, %v1103
    %v1112 = vadd.f32 %v215, %v1104
    %v1113 = vadd.f32 %v216, %v1105
    %v1114 = vtanh.pop %v1110
    %v1115 = vmul.f32 %v1114, 0.5
    %v1116 = vadd.f32 %v1115, 0.5
    %v1117 = vtanh.pop %v1111
    %v1118 = vmul.f32 %v1117, 0.5
    %v1119 = vadd.f32 %v1118, 0.5
    %v1120 = vtanh.pop %v1112
    %v1121 = vtanh.pop %v1113
    %v1122 = vmul.f32 %v1121, 0.5
    %v1123 = vadd.f32 %v1122, 0.5
    %v1125 = vrot.slane %v1012, 7
    %v1127 = vmul.f32 %v1119, %v1125
    %v1128 = vmul.f32 %v1116, %v1120
    %v1129 = vadd.f32 %v1127, %v1128
    %v1130 = vtanh.pop %v1129
    %v1131 = vmul.f32 %v1123, %v1130
    %v1132 = vld [vmem:[#allocation6] sm:$0xff]
    %v1133 = vld [vmem:[#allocation6 + $0x8] sm:$0xff]
    %v1134 = vld [vmem:[#allocation6 + $0x10] sm:$0xff]
    %v1135 = vld [vmem:[#allocation6 + $0x18] sm:$0xff]
    %v1136 = vld [vmem:[#allocation6 + $0x20] sm:$0xff]
    %v1137 = vld [vmem:[#allocation6 + $0x28] sm:$0xff]
    %v1138 = vld [vmem:[#allocation6 + $0x30] sm:$0xff]
    %v1139 = vld [vmem:[#allocation6 + $0x38] sm:$0xff]
    %v1140 = vld [vmem:[#allocation6 + $0x40] sm:$0xff]
    %v1141 = vld [vmem:[#allocation6 + $0x48] sm:$0xff]
    %v1142 = vld [vmem:[#allocation6 + $0x50] sm:$0xff]
    %v1143 = vld [vmem:[#allocation6 + $0x58] sm:$0xff]
    %v1144 = vld [vmem:[#allocation6 + $0x60] sm:$0xff]
    %v1145 = vld [vmem:[#allocation6 + $0x68] sm:$0xff]
    %v1146 = vld [vmem:[#allocation6 + $0x70] sm:$0xff]
    %v1147 = vld [vmem:[#allocation6 + $0x78] sm:$0xff]
    %v1148 = vunpack.c.l.bf16 %v1132
    %v1149 = vunpack.c.h.bf16 %v1132
    %v1150 = vunpack.c.l.bf16 %v1133
    %v1151 = vunpack.c.h.bf16 %v1133
    %v1152 = vunpack.c.l.bf16 %v1134
    %v1153 = vunpack.c.h.bf16 %v1134
    %v1154 = vunpack.c.l.bf16 %v1135
    %v1155 = vunpack.c.h.bf16 %v1135
    %v1156 = vunpack.c.l.bf16 %v1136
    %v1157 = vunpack.c.h.bf16 %v1136
    %v1158 = vunpack.c.l.bf16 %v1137
    %v1159 = vunpack.c.h.bf16 %v1137
    %v1160 = vunpack.c.l.bf16 %v1138
    %v1161 = vunpack.c.h.bf16 %v1138
    %v1162 = vunpack.c.l.bf16 %v1139
    %v1163 = vunpack.c.h.bf16 %v1139
    %v1164 = vunpack.c.l.bf16 %v1140
    %v1165 = vunpack.c.h.bf16 %v1140
    %v1166 = vunpack.c.l.bf16 %v1141
    %v1167 = vunpack.c.h.bf16 %v1141
    %v1168 = vunpack.c.l.bf16 %v1142
    %v1169 = vunpack.c.h.bf16 %v1142
    %v1170 = vunpack.c.l.bf16 %v1143
    %v1171 = vunpack.c.h.bf16 %v1143
    %v1172 = vunpack.c.l.bf16 %v1144
    %v1173 = vunpack.c.h.bf16 %v1144
    %v1174 = vunpack.c.l.bf16 %v1145
    %v1175 = vunpack.c.h.bf16 %v1145
    %v1176 = vunpack.c.l.bf16 %v1146
    %v1177 = vunpack.c.h.bf16 %v1146
    %v1178 = vunpack.c.l.bf16 %v1147
    %v1179 = vunpack.c.h.bf16 %v1147
    %v1180 = vld [vmem:[#allocation8] sm:$0xff]
    %v1181 = vld [vmem:[#allocation8 + $0x8] sm:$0xff]
    %v1182 = vld [vmem:[#allocation8 + $0x10] sm:$0xff]
    %v1183 = vld [vmem:[#allocation8 + $0x18] sm:$0xff]
    %v1184 = vld [vmem:[#allocation8 + $0x20] sm:$0xff]
    %v1185 = vld [vmem:[#allocation8 + $0x28] sm:$0xff]
    %v1186 = vld [vmem:[#allocation8 + $0x30] sm:$0xff]
    %v1187 = vld [vmem:[#allocation8 + $0x38] sm:$0xff]
    %v1188 = vld [vmem:[#allocation8 + $0x40] sm:$0xff]
    %v1189 = vld [vmem:[#allocation8 + $0x48] sm:$0xff]
    %v1190 = vld [vmem:[#allocation8 + $0x50] sm:$0xff]
    %v1191 = vld [vmem:[#allocation8 + $0x58] sm:$0xff]
    %v1192 = vld [vmem:[#allocation8 + $0x60] sm:$0xff]
    %v1193 = vld [vmem:[#allocation8 + $0x68] sm:$0xff]
    %v1194 = vld [vmem:[#allocation8 + $0x70] sm:$0xff]
    %v1195 = vld [vmem:[#allocation8 + $0x78] sm:$0xff]
    %v1196 = vunpack.c.l.bf16 %v1180
    %v1197 = vunpack.c.h.bf16 %v1180
    %v1198 = vunpack.c.l.bf16 %v1181
    %v1199 = vunpack.c.h.bf16 %v1181
    %v1200 = vunpack.c.l.bf16 %v1182
    %v1201 = vunpack.c.h.bf16 %v1182
    %v1202 = vunpack.c.l.bf16 %v1183
    %v1203 = vunpack.c.h.bf16 %v1183
    %v1204 = vunpack.c.l.bf16 %v1184
    %v1205 = vunpack.c.h.bf16 %v1184
    %v1206 = vunpack.c.l.bf16 %v1185
    %v1207 = vunpack.c.h.bf16 %v1185
    %v1208 = vunpack.c.l.bf16 %v1186
    %v1209 = vunpack.c.h.bf16 %v1186
    %v1210 = vunpack.c.l.bf16 %v1187
    %v1211 = vunpack.c.h.bf16 %v1187
    %v1212 = vunpack.c.l.bf16 %v1188
    %v1213 = vunpack.c.h.bf16 %v1188
    %v1214 = vunpack.c.l.bf16 %v1189
    %v1215 = vunpack.c.h.bf16 %v1189
    %v1216 = vunpack.c.l.bf16 %v1190
    %v1217 = vunpack.c.h.bf16 %v1190
    %v1218 = vunpack.c.l.bf16 %v1191
    %v1219 = vunpack.c.h.bf16 %v1191
    %v1220 = vunpack.c.l.bf16 %v1192
    %v1221 = vunpack.c.h.bf16 %v1192
    %v1222 = vunpack.c.l.bf16 %v1193
    %v1223 = vunpack.c.h.bf16 %v1193
    %v1224 = vunpack.c.l.bf16 %v1194
    %v1225 = vunpack.c.h.bf16 %v1194
    %v1226 = vunpack.c.l.bf16 %v1195
    %v1227 = vunpack.c.h.bf16 %v1195
    %v1228 = vld [vmem:[%s6] sm:$0x3]
    %v1230 = vrot.slane %v1131, 7
    %v1233 = vperm.slane %v1228, 0
    %v1234 = vperm.slane %v1228, 1
    %1237 = vmatpush.msra.mxu0 %v1178
    %1238 = vmatpush.msra.mxu0 %v1176
    %1239 = vmatpush.msra.mxu0 %v1174
    %1240 = vmatpush.msra.mxu0 %v1172
    %1241 = vmatpush.msra.mxu0 %v1170
    %1242 = vmatpush.msra.mxu0 %v1168
    %1243 = vmatpush.msra.mxu0 %v1166
    %1244 = vmatpush.msra.mxu0 %v1164
    %1245 = vmatpush.msra.mxu0 %v1162
    %1246 = vmatpush.msra.mxu0 %v1160
    %1247 = vmatpush.msra.mxu0 %v1158
    %1248 = vmatpush.msra.mxu0 %v1156
    %1249 = vmatpush.msra.mxu0 %v1154
    %1250 = vmatpush.msra.mxu0 %v1152
    %1251 = vmatpush.msra.mxu0 %v1150
    %1252 = vmatpush.msra.mxu0 %v1148
    %1253 = vmatmul.f32.gmra.mxu0 %v1230
    %v1254 = vpop.f32.mrf.mxu0
    %v1255 = vadd.f32 %v1233, %v1254
    %1256 = vdwg.mxu0
    %1257 = vmatpush.msra.mxu0 %v1179
    %1258 = vmatpush.msra.mxu0 %v1177
    %1259 = vmatpush.msra.mxu0 %v1175
    %1260 = vmatpush.msra.mxu0 %v1173
    %1261 = vmatpush.msra.mxu0 %v1171
    %1262 = vmatpush.msra.mxu0 %v1169
    %1263 = vmatpush.msra.mxu0 %v1167
    %1264 = vmatpush.msra.mxu0 %v1165
    %1265 = vmatpush.msra.mxu0 %v1163
    %1266 = vmatpush.msra.mxu0 %v1161
    %1267 = vmatpush.msra.mxu0 %v1159
    %1268 = vmatpush.msra.mxu0 %v1157
    %1269 = vmatpush.msra.mxu0 %v1155
    %1270 = vmatpush.msra.mxu0 %v1153
    %1271 = vmatpush.msra.mxu0 %v1151
    %1272 = vmatpush.msra.mxu0 %v1149
    %1273 = vmatmul.f32.gmra.mxu0 %v1230
    %v1274 = vpop.f32.mrf.mxu0
    %v1275 = vadd.f32 %v1234, %v1274
    %1276 = vdwg.mxu0
    %v1277 = vlaneseq
    %v1278 = vand.u32 %v1277, 127
    %vm1279 = vcmp.lt.s32.totalorder %v1278, 64
    %v1280 = vsel %vm1279, 1.0, 0.5
    %v1281 = vsel %vm1279, 0.0, 0.5
    %v1282 = vld [vmem:[%s7] sm:$0x1]
    %v1283 = vld [vmem:[#allocation2] sm:$0x1]
    %1284 = vmatpush.msra.mxu0 %v1226
    %1285 = vmatpush.msra.mxu0 %v1224
    %1286 = vmatpush.msra.mxu0 %v1222
    %1287 = vmatpush.msra.mxu0 %v1220
    %1288 = vmatpush.msra.mxu0 %v1218
    %1289 = vmatpush.msra.mxu0 %v1216
    %1290 = vmatpush.msra.mxu0 %v1214
    %1291 = vmatpush.msra.mxu0 %v1212
    %1292 = vmatpush.msra.mxu0 %v1210
    %1293 = vmatpush.msra.mxu0 %v1208
    %1294 = vmatpush.msra.mxu0 %v1206
    %1295 = vmatpush.msra.mxu0 %v1204
    %1296 = vmatpush.msra.mxu0 %v1202
    %1297 = vmatpush.msra.mxu0 %v1200
    %1298 = vmatpush.msra.mxu0 %v1198
    %1299 = vmatpush.msra.mxu0 %v1196
    %1300 = vmatmul.f32.gmra.mxu0 0.0
    %v1301 = vpop.f32.mrf.mxu0
    %v1302 = vadd.f32 0.0, %v1301
    %1303 = vdwg.mxu0
    %1304 = vmatpush.msra.mxu0 %v1227
    %1305 = vmatpush.msra.mxu0 %v1225
    %1306 = vmatpush.msra.mxu0 %v1223
    %1307 = vmatpush.msra.mxu0 %v1221
    %1308 = vmatpush.msra.mxu0 %v1219
    %1309 = vmatpush.msra.mxu0 %v1217
    %1310 = vmatpush.msra.mxu0 %v1215
    %1311 = vmatpush.msra.mxu0 %v1213
    %1312 = vmatpush.msra.mxu0 %v1211
    %1313 = vmatpush.msra.mxu0 %v1209
    %1314 = vmatpush.msra.mxu0 %v1207
    %1315 = vmatpush.msra.mxu0 %v1205
    %1316 = vmatpush.msra.mxu0 %v1203
    %1317 = vmatpush.msra.mxu0 %v1201
    %1318 = vmatpush.msra.mxu0 %v1199
    %1319 = vmatpush.msra.mxu0 %v1197
    %1320 = vmatmul.f32.gmra.mxu0 0.0
    %v1321 = vpop.f32.mrf.mxu0
    %v1322 = vadd.f32 0.0, %v1321
    %1323 = vdwg.mxu0
    %v1324 = vadd.f32 %v1255, %v1302
    %v1325 = vadd.f32 %v1275, %v1322
    %v1326 = vtanh.pop %v1324
    %v1327 = vmul.f32 %v1326, 0.5
    %v1328 = vadd.f32 %v1327, 0.5
    %v1329 = vtanh.pop %v1325
    %v1330 = vmul.f32 %v1280, %v1329
    %v1331 = vadd.f32 %v1330, %v1281
    %v1332 = vsel %vm1279, %v1331, 0.0
    %v1333 = vmul.f32 %v1328, %v1332
    %1334 = vrot.lane.b32.xlu0 %v1333, 64
    %v1335 = vpop.permute.xlu0 %1334
    %v1336 = vadd.f32 %v1333, %v1335
    %v1337 = vtanh.pop %v1336
    %v1338 = vmul.f32 %v1331, %v1337
    %v1339 = vmul.f32 %v1338, %v1282
    %vm1340 = vcmask 1040384
    %v1341 = vsel %vm1340, %v1339, 0.0
    %1342 = vadd.xlane.f32.xlu0 %v1341
    %v1343 = vpop.xlane.xlu0 %1342
    %vm1344 = vcmp.eq.s32.totalorder %v1278, 0
    %v1345 = vsel %vm1344, %v1343, 0.0
    %v1346 = vadd.f32 %v1345, 0.0
    %1347 = vmatpush.msra.mxu0 %v1226
    %1348 = vmatpush.msra.mxu0 %v1224
    %1349 = vmatpush.msra.mxu0 %v1222
    %1350 = vmatpush.msra.mxu0 %v1220
    %1351 = vmatpush.msra.mxu0 %v1218
    %1352 = vmatpush.msra.mxu0 %v1216
    %1353 = vmatpush.msra.mxu0 %v1214
    %1354 = vmatpush.msra.mxu0 %v1212
    %1355 = vmatpush.msra.mxu0 %v1210
    %1356 = vmatpush.msra.mxu0 %v1208
    %1357 = vmatpush.msra.mxu0 %v1206
    %1358 = vmatpush.msra.mxu0 %v1204
    %1359 = vmatpush.msra.mxu0 %v1202
    %1360 = vmatpush.msra.mxu0 %v1200
    %1361 = vmatpush.msra.mxu0 %v1198
    %1362 = vmatpush.msra.mxu0 %v1196
    %1363 = vmatmul.f32.gmra.mxu0 %v1338
    %v1364 = vpop.f32.mrf.mxu0
    %v1365 = vadd.f32 0.0, %v1364
    %1366 = vdwg.mxu0
    %1367 = vmatpush.msra.mxu0 %v1227
    %1368 = vmatpush.msra.mxu0 %v1225
    %1369 = vmatpush.msra.mxu0 %v1223
    %1370 = vmatpush.msra.mxu0 %v1221
    %1371 = vmatpush.msra.mxu0 %v1219
    %1372 = vmatpush.msra.mxu0 %v1217
    %1373 = vmatpush.msra.mxu0 %v1215
    %1374 = vmatpush.msra.mxu0 %v1213
    %1375 = vmatpush.msra.mxu0 %v1211
    %1376 = vmatpush.msra.mxu0 %v1209
    %1377 = vmatpush.msra.mxu0 %v1207
    %1378 = vmatpush.msra.mxu0 %v1205
    %1379 = vmatpush.msra.mxu0 %v1203
    %1380 = vmatpush.msra.mxu0 %v1201
    %1381 = vmatpush.msra.mxu0 %v1199
    %1382 = vmatpush.msra.mxu0 %v1197
    %1383 = vmatmul.f32.gmra.mxu0 %v1338
    %v1384 = vpop.f32.mrf.mxu0
    %v1385 = vadd.f32 0.0, %v1384
    %1386 = vdwg.mxu0
    %v1387 = vadd.f32 %v1255, %v1365
    %v1388 = vadd.f32 %v1275, %v1385
    %v1389 = vtanh.pop %v1387
    %v1390 = vmul.f32 %v1389, 0.5
    %v1391 = vadd.f32 %v1390, 0.5
    %v1392 = vtanh.pop %v1388
    %v1393 = vmul.f32 %v1280, %v1392
    %v1394 = vadd.f32 %v1393, %v1281
    %v1395 = vsel %vm1279, %v1394, %v1336
    %v1396 = vmul.f32 %v1391, %v1395
    %1397 = vrot.lane.b32.xlu0 %v1396, 64
    %v1398 = vpop.permute.xlu0 %1397
    %v1399 = vadd.f32 %v1396, %v1398
    %v1400 = vtanh.pop %v1399
    %v1401 = vmul.f32 %v1394, %v1400
    %v1402 = vmul.f32 %v1401, %v1282
    %v1403 = vsel %vm1340, %v1402, 0.0
    %1404 = vadd.xlane.f32.xlu0 %v1403
    %v1405 = vpop.xlane.xlu0 %1404
    %vm1406 = vcmp.eq.s32.totalorder %v1278, 1
    %v1407 = vsel %vm1406, %v1405, 0.0
    %v1408 = vadd.f32 %v1346, %v1407
    %1409 = vmatpush.msra.mxu0 %v1226
    %1410 = vmatpush.msra.mxu0 %v1224
    %1411 = vmatpush.msra.mxu0 %v1222
    %1412 = vmatpush.msra.mxu0 %v1220
    %1413 = vmatpush.msra.mxu0 %v1218
    %1414 = vmatpush.msra.mxu0 %v1216
    %1415 = vmatpush.msra.mxu0 %v1214
    %1416 = vmatpush.msra.mxu0 %v1212
    %1417 = vmatpush.msra.mxu0 %v1210
    %1418 = vmatpush.msra.mxu0 %v1208
    %1419 = vmatpush.msra.mxu0 %v1206
    %1420 = vmatpush.msra.mxu0 %v1204
    %1421 = vmatpush.msra.mxu0 %v1202
    %1422 = vmatpush.msra.mxu0 %v1200
    %1423 = vmatpush.msra.mxu0 %v1198
    %1424 = vmatpush.msra.mxu0 %v1196
    %1425 = vmatmul.f32.gmra.mxu0 %v1401
    %v1426 = vpop.f32.mrf.mxu0
    %v1427 = vadd.f32 0.0, %v1426
    %1428 = vdwg.mxu0
    %1429 = vmatpush.msra.mxu0 %v1227
    %1430 = vmatpush.msra.mxu0 %v1225
    %1431 = vmatpush.msra.mxu0 %v1223
    %1432 = vmatpush.msra.mxu0 %v1221
    %1433 = vmatpush.msra.mxu0 %v1219
    %1434 = vmatpush.msra.mxu0 %v1217
    %1435 = vmatpush.msra.mxu0 %v1215
    %1436 = vmatpush.msra.mxu0 %v1213
    %1437 = vmatpush.msra.mxu0 %v1211
    %1438 = vmatpush.msra.mxu0 %v1209
    %1439 = vmatpush.msra.mxu0 %v1207
    %1440 = vmatpush.msra.mxu0 %v1205
    %1441 = vmatpush.msra.mxu0 %v1203
    %1442 = vmatpush.msra.mxu0 %v1201
    %1443 = vmatpush.msra.mxu0 %v1199
    %1444 = vmatpush.msra.mxu0 %v1197
    %1445 = vmatmul.f32.gmra.mxu0 %v1401
    %v1446 = vpop.f32.mrf.mxu0
    %v1447 = vadd.f32 0.0, %v1446
    %1448 = vdwg.mxu0
    %v1449 = vadd.f32 %v1255, %v1427
    %v1450 = vadd.f32 %v1275, %v1447
    %v1451 = vtanh.pop %v1449
    %v1452 = vmul.f32 %v1451, 0.5
    %v1453 = vadd.f32 %v1452, 0.5
    %v1454 = vtanh.pop %v1450
    %v1455 = vmul.f32 %v1280, %v1454
    %v1456 = vadd.f32 %v1455, %v1281
    %v1457 = vsel %vm1279, %v1456, %v1399
    %v1458 = vmul.f32 %v1453, %v1457
    %1459 = vrot.lane.b32.xlu0 %v1458, 64
    %v1460 = vpop.permute.xlu0 %1459
    %v1461 = vadd.f32 %v1458, %v1460
    %v1462 = vtanh.pop %v1461
    %v1463 = vmul.f32 %v1456, %v1462
    %v1464 = vmul.f32 %v1463, %v1282
    %v1465 = vsel %vm1340, %v1464, 0.0
    %1466 = vadd.xlane.f32.xlu0 %v1465
    %v1467 = vpop.xlane.xlu0 %1466
    %vm1468 = vcmp.eq.s32.totalorder %v1278, 2
    %v1469 = vsel %vm1468, %v1467, 0.0
    %v1470 = vadd.f32 %v1408, %v1469
    %1471 = vmatpush.msra.mxu0 %v1226
    %1472 = vmatpush.msra.mxu0 %v1224
    %1473 = vmatpush.msra.mxu0 %v1222
    %1474 = vmatpush.msra.mxu0 %v1220
    %1475 = vmatpush.msra.mxu0 %v1218
    %1476 = vmatpush.msra.mxu0 %v1216
    %1477 = vmatpush.msra.mxu0 %v1214
    %1478 = vmatpush.msra.mxu0 %v1212
    %1479 = vmatpush.msra.mxu0 %v1210
    %1480 = vmatpush.msra.mxu0 %v1208
    %1481 = vmatpush.msra.mxu0 %v1206
    %1482 = vmatpush.msra.mxu0 %v1204
    %1483 = vmatpush.msra.mxu0 %v1202
    %1484 = vmatpush.msra.mxu0 %v1200
    %1485 = vmatpush.msra.mxu0 %v1198
    %1486 = vmatpush.msra.mxu0 %v1196
    %1487 = vmatmul.f32.gmra.mxu0 %v1463
    %v1488 = vpop.f32.mrf.mxu0
    %v1489 = vadd.f32 0.0, %v1488
    %1490 = vdwg.mxu0
    %1491 = vmatpush.msra.mxu0 %v1227
    %1492 = vmatpush.msra.mxu0 %v1225
    %1493 = vmatpush.msra.mxu0 %v1223
    %1494 = vmatpush.msra.mxu0 %v1221
    %1495 = vmatpush.msra.mxu0 %v1219
    %1496 = vmatpush.msra.mxu0 %v1217
    %1497 = vmatpush.msra.mxu0 %v1215
    %1498 = vmatpush.msra.mxu0 %v1213
    %1499 = vmatpush.msra.mxu0 %v1211
    %1500 = vmatpush.msra.mxu0 %v1209
    %1501 = vmatpush.msra.mxu0 %v1207
    %1502 = vmatpush.msra.mxu0 %v1205
    %1503 = vmatpush.msra.mxu0 %v1203
    %1504 = vmatpush.msra.mxu0 %v1201
    %1505 = vmatpush.msra.mxu0 %v1199
    %1506 = vmatpush.msra.mxu0 %v1197
    %1507 = vmatmul.f32.gmra.mxu0 %v1463
    %v1508 = vpop.f32.mrf.mxu0
    %v1509 = vadd.f32 0.0, %v1508
    %1510 = vdwg.mxu0
    %v1511 = vadd.f32 %v1255, %v1489
    %v1512 = vadd.f32 %v1275, %v1509
    %v1513 = vtanh.pop %v1511
    %v1514 = vmul.f32 %v1513, 0.5
    %v1515 = vadd.f32 %v1514, 0.5
    %v1516 = vtanh.pop %v1512
    %v1517 = vmul.f32 %v1280, %v1516
    %v1518 = vadd.f32 %v1517, %v1281
    %v1519 = vsel %vm1279, %v1518, %v1461
    %v1520 = vmul.f32 %v1515, %v1519
    %1521 = vrot.lane.b32.xlu0 %v1520, 64
    %v1522 = vpop.permute.xlu0 %1521
    %v1523 = vadd.f32 %v1520, %v1522
    %v1524 = vtanh.pop %v1523
    %v1525 = vmul.f32 %v1518, %v1524
    %v1526 = vmul.f32 %v1525, %v1282
    %v1527 = vsel %vm1340, %v1526, 0.0
    %1528 = vadd.xlane.f32.xlu0 %v1527
    %v1529 = vpop.xlane.xlu0 %1528
    %vm1530 = vcmp.eq.s32.totalorder %v1278, 3
    %v1531 = vsel %vm1530, %v1529, 0.0
    %v1532 = vadd.f32 %v1470, %v1531
    %1533 = vmatpush.msra.mxu0 %v1226
    %1534 = vmatpush.msra.mxu0 %v1224
    %1535 = vmatpush.msra.mxu0 %v1222
    %1536 = vmatpush.msra.mxu0 %v1220
    %1537 = vmatpush.msra.mxu0 %v1218
    %1538 = vmatpush.msra.mxu0 %v1216
    %1539 = vmatpush.msra.mxu0 %v1214
    %1540 = vmatpush.msra.mxu0 %v1212
    %1541 = vmatpush.msra.mxu0 %v1210
    %1542 = vmatpush.msra.mxu0 %v1208
    %1543 = vmatpush.msra.mxu0 %v1206
    %1544 = vmatpush.msra.mxu0 %v1204
    %1545 = vmatpush.msra.mxu0 %v1202
    %1546 = vmatpush.msra.mxu0 %v1200
    %1547 = vmatpush.msra.mxu0 %v1198
    %1548 = vmatpush.msra.mxu0 %v1196
    %1549 = vmatmul.f32.gmra.mxu0 %v1525
    %v1550 = vpop.f32.mrf.mxu0
    %v1551 = vadd.f32 0.0, %v1550
    %1552 = vdwg.mxu0
    %1553 = vmatpush.msra.mxu0 %v1227
    %1554 = vmatpush.msra.mxu0 %v1225
    %1555 = vmatpush.msra.mxu0 %v1223
    %1556 = vmatpush.msra.mxu0 %v1221
    %1557 = vmatpush.msra.mxu0 %v1219
    %1558 = vmatpush.msra.mxu0 %v1217
    %1559 = vmatpush.msra.mxu0 %v1215
    %1560 = vmatpush.msra.mxu0 %v1213
    %1561 = vmatpush.msra.mxu0 %v1211
    %1562 = vmatpush.msra.mxu0 %v1209
    %1563 = vmatpush.msra.mxu0 %v1207
    %1564 = vmatpush.msra.mxu0 %v1205
    %1565 = vmatpush.msra.mxu0 %v1203
    %1566 = vmatpush.msra.mxu0 %v1201
    %1567 = vmatpush.msra.mxu0 %v1199
    %1568 = vmatpush.msra.mxu0 %v1197
    %1569 = vmatmul.f32.gmra.mxu0 %v1525
    %v1570 = vpop.f32.mrf.mxu0
    %v1571 = vadd.f32 0.0, %v1570
    %1572 = vdwg.mxu0
    %v1573 = vadd.f32 %v1255, %v1551
    %v1574 = vadd.f32 %v1275, %v1571
    %v1575 = vtanh.pop %v1573
    %v1576 = vmul.f32 %v1575, 0.5
    %v1577 = vadd.f32 %v1576, 0.5
    %v1578 = vtanh.pop %v1574
    %v1579 = vmul.f32 %v1280, %v1578
    %v1580 = vadd.f32 %v1579, %v1281
    %v1581 = vsel %vm1279, %v1580, %v1523
    %v1582 = vmul.f32 %v1577, %v1581
    %1583 = vrot.lane.b32.xlu0 %v1582, 64
    %v1584 = vpop.permute.xlu0 %1583
    %v1585 = vadd.f32 %v1582, %v1584
    %v1586 = vtanh.pop %v1585
    %v1587 = vmul.f32 %v1580, %v1586
    %v1588 = vmul.f32 %v1587, %v1282
    %v1589 = vsel %vm1340, %v1588, 0.0
    %1590 = vadd.xlane.f32.xlu0 %v1589
    %v1591 = vpop.xlane.xlu0 %1590
    %vm1592 = vcmp.eq.s32.totalorder %v1278, 4
    %v1593 = vsel %vm1592, %v1591, 0.0
    %v1594 = vadd.f32 %v1532, %v1593
    %1595 = vmatpush.msra.mxu0 %v1226
    %1596 = vmatpush.msra.mxu0 %v1224
    %1597 = vmatpush.msra.mxu0 %v1222
    %1598 = vmatpush.msra.mxu0 %v1220
    %1599 = vmatpush.msra.mxu0 %v1218
    %1600 = vmatpush.msra.mxu0 %v1216
    %1601 = vmatpush.msra.mxu0 %v1214
    %1602 = vmatpush.msra.mxu0 %v1212
    %1603 = vmatpush.msra.mxu0 %v1210
    %1604 = vmatpush.msra.mxu0 %v1208
    %1605 = vmatpush.msra.mxu0 %v1206
    %1606 = vmatpush.msra.mxu0 %v1204
    %1607 = vmatpush.msra.mxu0 %v1202
    %1608 = vmatpush.msra.mxu0 %v1200
    %1609 = vmatpush.msra.mxu0 %v1198
    %1610 = vmatpush.msra.mxu0 %v1196
    %1611 = vmatmul.f32.gmra.mxu0 %v1587
    %v1612 = vpop.f32.mrf.mxu0
    %v1613 = vadd.f32 0.0, %v1612
    %1614 = vdwg.mxu0
    %1615 = vmatpush.msra.mxu0 %v1227
    %1616 = vmatpush.msra.mxu0 %v1225
    %1617 = vmatpush.msra.mxu0 %v1223
    %1618 = vmatpush.msra.mxu0 %v1221
    %1619 = vmatpush.msra.mxu0 %v1219
    %1620 = vmatpush.msra.mxu0 %v1217
    %1621 = vmatpush.msra.mxu0 %v1215
    %1622 = vmatpush.msra.mxu0 %v1213
    %1623 = vmatpush.msra.mxu0 %v1211
    %1624 = vmatpush.msra.mxu0 %v1209
    %1625 = vmatpush.msra.mxu0 %v1207
    %1626 = vmatpush.msra.mxu0 %v1205
    %1627 = vmatpush.msra.mxu0 %v1203
    %1628 = vmatpush.msra.mxu0 %v1201
    %1629 = vmatpush.msra.mxu0 %v1199
    %1630 = vmatpush.msra.mxu0 %v1197
    %1631 = vmatmul.f32.gmra.mxu0 %v1587
    %v1632 = vpop.f32.mrf.mxu0
    %v1633 = vadd.f32 0.0, %v1632
    %1634 = vdwg.mxu0
    %v1635 = vadd.f32 %v1255, %v1613
    %v1636 = vadd.f32 %v1275, %v1633
    %v1637 = vtanh.pop %v1635
    %v1638 = vmul.f32 %v1637, 0.5
    %v1639 = vadd.f32 %v1638, 0.5
    %v1640 = vtanh.pop %v1636
    %v1641 = vmul.f32 %v1280, %v1640
    %v1642 = vadd.f32 %v1641, %v1281
    %v1643 = vsel %vm1279, %v1642, %v1585
    %v1644 = vmul.f32 %v1639, %v1643
    %1645 = vrot.lane.b32.xlu0 %v1644, 64
    %v1646 = vpop.permute.xlu0 %1645
    %v1647 = vadd.f32 %v1644, %v1646
    %v1648 = vtanh.pop %v1647
    %v1649 = vmul.f32 %v1642, %v1648
    %v1650 = vmul.f32 %v1649, %v1282
    %v1651 = vsel %vm1340, %v1650, 0.0
    %1652 = vadd.xlane.f32.xlu0 %v1651
    %v1653 = vpop.xlane.xlu0 %1652
    %vm1654 = vcmp.eq.s32.totalorder %v1278, 5
    %v1655 = vsel %vm1654, %v1653, 0.0
    %v1656 = vadd.f32 %v1594, %v1655
    %1657 = vmatpush.msra.mxu0 %v1226
    %1658 = vmatpush.msra.mxu0 %v1224
    %1659 = vmatpush.msra.mxu0 %v1222
    %1660 = vmatpush.msra.mxu0 %v1220
    %1661 = vmatpush.msra.mxu0 %v1218
    %1662 = vmatpush.msra.mxu0 %v1216
    %1663 = vmatpush.msra.mxu0 %v1214
    %1664 = vmatpush.msra.mxu0 %v1212
    %1665 = vmatpush.msra.mxu0 %v1210
    %1666 = vmatpush.msra.mxu0 %v1208
    %1667 = vmatpush.msra.mxu0 %v1206
    %1668 = vmatpush.msra.mxu0 %v1204
    %1669 = vmatpush.msra.mxu0 %v1202
    %1670 = vmatpush.msra.mxu0 %v1200
    %1671 = vmatpush.msra.mxu0 %v1198
    %1672 = vmatpush.msra.mxu0 %v1196
    %1673 = vmatmul.f32.gmra.mxu0 %v1649
    %v1674 = vpop.f32.mrf.mxu0
    %v1675 = vadd.f32 0.0, %v1674
    %1676 = vdwg.mxu0
    %1677 = vmatpush.msra.mxu0 %v1227
    %1678 = vmatpush.msra.mxu0 %v1225
    %1679 = vmatpush.msra.mxu0 %v1223
    %1680 = vmatpush.msra.mxu0 %v1221
    %1681 = vmatpush.msra.mxu0 %v1219
    %1682 = vmatpush.msra.mxu0 %v1217
    %1683 = vmatpush.msra.mxu0 %v1215
    %1684 = vmatpush.msra.mxu0 %v1213
    %1685 = vmatpush.msra.mxu0 %v1211
    %1686 = vmatpush.msra.mxu0 %v1209
    %1687 = vmatpush.msra.mxu0 %v1207
    %1688 = vmatpush.msra.mxu0 %v1205
    %1689 = vmatpush.msra.mxu0 %v1203
    %1690 = vmatpush.msra.mxu0 %v1201
    %1691 = vmatpush.msra.mxu0 %v1199
    %1692 = vmatpush.msra.mxu0 %v1197
    %1693 = vmatmul.f32.gmra.mxu0 %v1649
    %v1694 = vpop.f32.mrf.mxu0
    %v1695 = vadd.f32 0.0, %v1694
    %1696 = vdwg.mxu0
    %v1697 = vadd.f32 %v1255, %v1675
    %v1698 = vadd.f32 %v1275, %v1695
    %v1699 = vtanh.pop %v1697
    %v1700 = vmul.f32 %v1699, 0.5
    %v1701 = vadd.f32 %v1700, 0.5
    %v1702 = vtanh.pop %v1698
    %v1703 = vmul.f32 %v1280, %v1702
    %v1704 = vadd.f32 %v1703, %v1281
    %v1705 = vsel %vm1279, %v1704, %v1647
    %v1706 = vmul.f32 %v1701, %v1705
    %1707 = vrot.lane.b32.xlu0 %v1706, 64
    %v1708 = vpop.permute.xlu0 %1707
    %v1709 = vadd.f32 %v1706, %v1708
    %v1710 = vtanh.pop %v1709
    %v1711 = vmul.f32 %v1704, %v1710
    %v1712 = vmul.f32 %v1711, %v1282
    %v1713 = vsel %vm1340, %v1712, 0.0
    %1714 = vadd.xlane.f32.xlu0 %v1713
    %v1715 = vpop.xlane.xlu0 %1714
    %vm1716 = vcmp.eq.s32.totalorder %v1278, 6
    %v1717 = vsel %vm1716, %v1715, 0.0
    %v1718 = vadd.f32 %v1656, %v1717
    %1719 = vmatpush.msra.mxu0 %v1226
    %1720 = vmatpush.msra.mxu0 %v1224
    %1721 = vmatpush.msra.mxu0 %v1222
    %1722 = vmatpush.msra.mxu0 %v1220
    %1723 = vmatpush.msra.mxu0 %v1218
    %1724 = vmatpush.msra.mxu0 %v1216
    %1725 = vmatpush.msra.mxu0 %v1214
    %1726 = vmatpush.msra.mxu0 %v1212
    %1727 = vmatpush.msra.mxu0 %v1210
    %1728 = vmatpush.msra.mxu0 %v1208
    %1729 = vmatpush.msra.mxu0 %v1206
    %1730 = vmatpush.msra.mxu0 %v1204
    %1731 = vmatpush.msra.mxu0 %v1202
    %1732 = vmatpush.msra.mxu0 %v1200
    %1733 = vmatpush.msra.mxu0 %v1198
    %1734 = vmatpush.msra.mxu0 %v1196
    %1735 = vmatmul.f32.gmra.mxu0 %v1711
    %v1736 = vpop.f32.mrf.mxu0
    %v1737 = vadd.f32 0.0, %v1736
    %1738 = vdwg.mxu0
    %1739 = vmatpush.msra.mxu0 %v1227
    %1740 = vmatpush.msra.mxu0 %v1225
    %1741 = vmatpush.msra.mxu0 %v1223
    %1742 = vmatpush.msra.mxu0 %v1221
    %1743 = vmatpush.msra.mxu0 %v1219
    %1744 = vmatpush.msra.mxu0 %v1217
    %1745 = vmatpush.msra.mxu0 %v1215
    %1746 = vmatpush.msra.mxu0 %v1213
    %1747 = vmatpush.msra.mxu0 %v1211
    %1748 = vmatpush.msra.mxu0 %v1209
    %1749 = vmatpush.msra.mxu0 %v1207
    %1750 = vmatpush.msra.mxu0 %v1205
    %1751 = vmatpush.msra.mxu0 %v1203
    %1752 = vmatpush.msra.mxu0 %v1201
    %1753 = vmatpush.msra.mxu0 %v1199
    %1754 = vmatpush.msra.mxu0 %v1197
    %1755 = vmatmul.f32.gmra.mxu0 %v1711
    %v1756 = vpop.f32.mrf.mxu0
    %v1757 = vadd.f32 0.0, %v1756
    %1758 = vdwg.mxu0
    %v1759 = vadd.f32 %v1255, %v1737
    %v1760 = vadd.f32 %v1275, %v1757
    %v1761 = vtanh.pop %v1759
    %v1762 = vmul.f32 %v1761, 0.5
    %v1763 = vadd.f32 %v1762, 0.5
    %v1764 = vtanh.pop %v1760
    %v1765 = vmul.f32 %v1280, %v1764
    %v1766 = vadd.f32 %v1765, %v1281
    %v1767 = vsel %vm1279, %v1766, %v1709
    %v1768 = vmul.f32 %v1763, %v1767
    %1769 = vrot.lane.b32.xlu0 %v1768, 64
    %v1770 = vpop.permute.xlu0 %1769
    %v1771 = vadd.f32 %v1768, %v1770
    %v1772 = vtanh.pop %v1771
    %v1773 = vmul.f32 %v1766, %v1772
    %v1774 = vmul.f32 %v1773, %v1282
    %v1775 = vsel %vm1340, %v1774, 0.0
    %1776 = vadd.xlane.f32.xlu0 %v1775
    %v1777 = vpop.xlane.xlu0 %1776
    %vm1778 = vcmp.eq.s32.totalorder %v1278, 7
    %v1779 = vsel %vm1778, %v1777, 0.0
    %v1780 = vadd.f32 %v1718, %v1779
    %1782 = vset.pattern.permute.xlu0 0
    %1783 = vperm.xlu0 %1782, %v1283
    %v1784 = vpop.permute.xlu0 %1783
    %v1786 = vperm.slane %v1784, 0
    %v1787 = vadd.f32 %v1780, %v1786
    %vm1788 = vcmask 57344
    %1789 = vst.msk [vmem:[#allocation9] sm:$0x1] %vm1788, %v1787
    // Predicated region
    $region50: #{tpu_custom_call.1} parent=1 // pred_check
      _
    $region51: #{tpu_custom_call.1} parent=1 // pred_check_branch
      %1791 = sbr.rel (0) target = $region53
    $region52: #{tpu_custom_call.1} parent=1 // pred_region
      %1793 = vsyncadd [#allocation5], 0
      %s1795 = sshll.u32 [#allocation9], 4
      %s1796 = int_to_ptr.vmem [resolvable:$true] %s1795
      %s1797 = sshll.u32 %s9, 4
      %s1798 = int_to_ptr.hbm [resolvable:$true] %s1797
      %1800 = dma.vmem_to_hbm [thread:$0]  %s1796, 16, %s1798, [#allocation5]
    $region53: #{tpu_custom_call.1} parent=1 // pred_fallthru
      _
    // Predicated region
    $region54: #{tpu_custom_call.1} parent=1 // pred_check
      _
    $region55: #{tpu_custom_call.1} parent=1 // pred_check_branch
      %1802 = sbr.rel (0) target = $region57
    $region56: #{tpu_custom_call.1} parent=1 // pred_region
      %1804 = dma.done [#allocation5], 16
    $region57: #{tpu_custom_call.1} parent=1 // pred_fallthru
      _
    %1805 = vsyncpa [#allocation4], 1
    %1806 = vsyncpa [#allocation7], 1
    %1807 = vsyncpa [#allocation5], 1

</llo_original>
